<compile_context>
chip_gen: v7x
topology: tpu7x:2x2x1
jax: 0.10.0
libtpu: 0.0.40
codegen_flags: <defaults>
</compile_context>

<pallas_src>
import jax
import jax.numpy as jnp
import numpy as np
from jax.experimental import pallas as pl
from jax.experimental.pallas import tpu as pltpu


def _round_up(x, m):
    return ((x + m - 1) // m) * m


# ----------------------------------------------------------------------------
# Pallas kernel: one leaf-tile (TL leaves x K neighbors) per grid step.
# refs:
#   cat_ref  : (TL*K, 2E)  packed features; lanes [0,E) = W_tmp[neighbor] rows,
#                          lanes [E,2E) = Leaf_emb[node] rows
#   mask_ref : (TL, K)     additive mask, K on the lane axis
#   wsm_ref  : (TL, K)     softmax(weight), precomputed in the wrapper
#   w_ref    : (2E, A)     Leaf_W_attention reordered to match the packing
#   b_ref    : (1, A)
#   v_ref    : (1, A)
#   out_ref  : (TL, E)
# ----------------------------------------------------------------------------
def _leaf_attn_kernel(cat_ref, mask_ref, wsm_ref, w_ref, b_ref, v_ref, out_ref):
    TL, K = mask_ref.shape
    E = out_ref.shape[-1]

    # Upcast right after load (stream may arrive as bf16); compute stays f32.
    x = cat_ref[...].astype(jnp.float32)                       # (TL*K, 2E)
    neigh = x[:, :E]                                           # (TL*K, E)

    # cat(neigh, node) @ [[W2],[W1]]  ==  node @ W1 + neigh @ W2
    # -> one MXU matmul, M = TL*K, contraction 2E (merged projections).
    tmp = jnp.dot(x, w_ref[...], preferred_element_type=jnp.float32) + b_ref[...]

    # nn.LeakyReLU() default negative_slope = 0.01
    mlp = jnp.where(tmp >= 0.0, tmp, 0.01 * tmp)               # (TL*K, A)

    # Score projection: VPU broadcast-multiply + lane reduce over A (MXU is
    # nearly idle either way; this keeps K on lanes so both softmax reductions
    # are plain last-axis reduces).
    mlp3 = mlp.reshape(TL, K, -1)                              # (TL, K, A)
    scores = jnp.sum(mlp3 * v_ref[...], axis=-1) + mask_ref[...]   # (TL, K)

    # softmax over the K neighbors (exact divide for tight parity).
    scores = scores - jnp.max(scores, axis=-1, keepdims=True)
    e = jnp.exp(scores)
    attn = e / jnp.sum(e, axis=-1, keepdims=True)              # (TL, K)
    attn = attn * wsm_ref[...]

    # weighted reduction over neighbors -> (TL, E)
    neigh3 = neigh.reshape(TL, K, E)
    out_ref[...] = jnp.sum(neigh3 * attn[:, :, None], axis=1).astype(out_ref.dtype)


def leaf_group_attention(node_emb, neigh_emb, mask, weight, W_attention, b, v,
                         *, max_tl=512, stream_dtype=jnp.float32):
    """Runs the Pallas kernel for one group. Returns tempEmb (L, E)."""
    L, K, E = node_emb.shape
    A = W_attention.shape[1]

    # Leaf tiling: whole group in one fat step when it fits, else TL=512/step.
    if L <= max_tl:
        TL = _round_up(L, 8)
    else:
        TL = max_tl                       # multiple of 8
    Lp = _round_up(L, TL)
    if Lp != L:
        pad = Lp - L
        node_emb = jnp.pad(node_emb, ((0, pad), (0, 0), (0, 0)))
        neigh_emb = jnp.pad(neigh_emb, ((0, pad), (0, 0), (0, 0)))
        mask = jnp.pad(mask, ((0, pad), (0, 0)))
        weight = jnp.pad(weight, ((0, pad), (0, 0)))

    # Lane packing: one (Lp*K, 2E) stream, neighbor features FIRST so the
    # kernel's weighted sum reads lanes [0, E).  Under jit XLA fuses the two
    # gathers directly into this concat (single materialization).
    cat = jnp.concatenate([neigh_emb, node_emb], axis=-1)      # (Lp, K, 2E)
    cat_flat = cat.reshape(Lp * K, 2 * E).astype(stream_dtype)

    mask2 = mask.astype(jnp.float32)                           # (Lp, K)
    # softmax(weight) depends only on the static weights -> precompute.
    wsm2 = jax.nn.softmax(weight.astype(jnp.float32), axis=1)  # (Lp, K)
    # Reorder W to match neighbor-first feature packing: [[W2],[W1]].
    W_cat = jnp.concatenate([W_attention[E:], W_attention[:E]],
                            axis=0).astype(jnp.float32)        # (2E, A)
    b2 = b.reshape(1, A).astype(jnp.float32)
    v2 = v.reshape(1, A).astype(jnp.float32)

    # TL=512 keeps the per-step working set at ~2-3 MiB (double-buffered packed
    # stream + f32 intermediates), well under the 16 MiB v5e scoped-VMEM
    # default; set vmem_limit_bytes here if max_tl is pushed past ~1024 on v5e.
    compiler_params = pltpu.CompilerParams(
        dimension_semantics=("parallel",))

    out = pl.pallas_call(
        _leaf_attn_kernel,
        out_shape=jax.ShapeDtypeStruct((Lp, E), jnp.float32),
        grid=(Lp // TL,),
        in_specs=[
            pl.BlockSpec((TL * K, 2 * E), lambda i: (i, 0)),   # packed stream
            pl.BlockSpec((TL, K), lambda i: (i, 0)),           # mask
            pl.BlockSpec((TL, K), lambda i: (i, 0)),           # softmax(weight)
            pl.BlockSpec((2 * E, A), lambda i: (0, 0)),        # W (reordered)
            pl.BlockSpec((1, A), lambda i: (0, 0)),            # b
            pl.BlockSpec((1, A), lambda i: (0, 0)),            # v
        ],
        out_specs=pl.BlockSpec((TL, E), lambda i: (i, 0)),
        compiler_params=compiler_params,
    )(cat_flat, mask2, wsm2, W_cat, b2, v2)
    return out[:L]


def leaf_attention_forward(leaf_emb, nodes, neighbors, masks, weights,
                           W_attention, b_attention, v_attention,
                           *, stream_dtype=jnp.float32):
    """Full forward pass of Leaf_attention (group loop + gather/scatter glue)."""
    W_tmp = leaf_emb                       # clone()
    for node, neighbor, mask, weight in zip(nodes, neighbors, masks, weights):
        node_emb = leaf_emb[node]          # gather from the ORIGINAL embeddings
        neigh_emb = W_tmp[neighbor]        # gather from the running copy
        temp_emb = leaf_group_attention(node_emb, neigh_emb, mask, weight,
                                        W_attention, b_attention, v_attention,
                                        stream_dtype=stream_dtype)
        # W_tmp[node[:, :, 0]] = tempEmb  (2-D group form -> node[:, 0])
        W_tmp = W_tmp.at[node[:, 0]].set(temp_emb)
    return W_tmp


# ----------------------------------------------------------------------------
# pure-JAX reference (mirrors the intended torch math) for correctness check
# ----------------------------------------------------------------------------
def leaf_attention_reference(leaf_emb, nodes, neighbors, masks, weights,
                             W_attention, b_attention, v_attention):
    W_tmp = leaf_emb
    for node, neighbor, mask, weight in zip(nodes, neighbors, masks, weights):
        node_tmp = leaf_emb[node]                       # (L, K, E)
        neigh_tmp = W_tmp[neighbor]                     # (L, K, E)
        attn_in = jnp.concatenate([node_tmp, neigh_tmp], axis=2)   # (L, K, 2E)
        tmp = attn_in @ W_attention + b_attention                  # (L, K, A)
        mlp = jnp.where(tmp >= 0, tmp, 0.01 * tmp)
        pre = mlp @ v_attention                                    # (L, K)
        pre = pre + mask
        attn = jax.nn.softmax(pre, axis=1)
        wsm = jax.nn.softmax(weight, axis=1)
        attn = attn * wsm
        temp_emb = jnp.sum(neigh_tmp * attn[:, :, None], axis=1)   # (L, E)
        W_tmp = W_tmp.at[node[:, 0]].set(temp_emb)
    return W_tmp


if __name__ == "__main__":
    V, E, A = 24, 32, 16   # num nodes, embDimSize, attentionDimSize

    key = jax.random.PRNGKey(0)
    k_emb, k_w, k_v, k_n0, k_n1, k_m0, k_m1, k_w0, k_w1 = jax.random.split(key, 9)

    # Parameters (match __init__ shapes / init style deterministically)
    leaf_emb = jax.random.normal(k_emb, (V, E), dtype=jnp.float32)
    W_attention = jax.random.uniform(k_w, (2 * E, A), dtype=jnp.float32)  # torch.rand
    b_attention = jnp.zeros((A,), dtype=jnp.float32)                       # torch.zeros
    v_attention = jax.random.uniform(k_v, (A,), dtype=jnp.float32)         # torch.rand

    # Two groups of (node, neighbor, mask, weight)
    # group 0: leaves 0..7, 4 neighbors each
    L0, K0 = 8, 4
    node0 = jnp.tile(jnp.arange(L0, dtype=jnp.int32)[:, None], (1, K0))
    neigh0 = jax.random.randint(k_n0, (L0, K0), 8, V, dtype=jnp.int32)
    mask0 = jnp.where(jax.random.uniform(k_m0, (L0, K0)) < 0.2, -1e9, 0.0).astype(jnp.float32)
    weight0 = jax.random.normal(k_w0, (L0, K0), dtype=jnp.float32)

    # group 1: leaves 8..13, 5 neighbors each
    L1, K1 = 6, 5
    node1 = jnp.tile(jnp.arange(8, 8 + L1, dtype=jnp.int32)[:, None], (1, K1))
    neigh1 = jax.random.randint(k_n1, (L1, K1), 0, V, dtype=jnp.int32)
    mask1 = jnp.where(jax.random.uniform(k_m1, (L1, K1)) < 0.2, -1e9, 0.0).astype(jnp.float32)
    weight1 = jax.random.normal(k_w1, (L1, K1), dtype=jnp.float32)

    nodes = [node0, node1]
    neighbors = [neigh0, neigh1]
    masks = [mask0, mask1]
    weights = [weight0, weight1]

    # Whole forward under one jit (per review): group dispatch folded into one
    # program, gathers fused into the packed stream.
    fwd = jax.jit(leaf_attention_forward, static_argnames=("stream_dtype",))

    ref = leaf_attention_reference(leaf_emb, nodes, neighbors, masks, weights,
                                   W_attention, b_attention, v_attention)
    ref = jax.block_until_ready(ref)

    # f32 streams: exact softmax divide -> tight parity with the reference.
    out = fwd(leaf_emb, nodes, neighbors, masks, weights,
              W_attention, b_attention, v_attention)
    out = jax.block_until_ready(out)
    np.testing.assert_allclose(np.asarray(out), np.asarray(ref),
                               rtol=1e-4, atol=1e-4)

    # bf16 HBM streams (v6e/v7x recommendation; halves DMA bytes of the
    # dominant tensors, compute/softmax stay f32).  Tolerance bounded by the
    # bf16 quantization of the embedding streams, not by the kernel.
    out_bf16 = fwd(leaf_emb, nodes, neighbors, masks, weights,
                   W_attention, b_attention, v_attention,
                   stream_dtype=jnp.bfloat16)
    out_bf16 = jax.block_until_ready(out_bf16)
    np.testing.assert_allclose(np.asarray(out_bf16), np.asarray(ref),
                               rtol=1e-1, atol=1e-1)

    print("KERNEL_OK")
</pallas_src>

<mosaic_0001>
module attributes {stable_mosaic.version = 11 : i64} {
  func.func @_leaf_attn_kernel(%arg0: i32, %arg1: memref<32x64xf32, #tpu.memory_space<vmem>>, %arg2: memref<8x4xf32, #tpu.memory_space<vmem>>, %arg3: memref<8x4xf32, #tpu.memory_space<vmem>>, %arg4: memref<64x16xf32, #tpu.memory_space<vmem>>, %arg5: memref<1x16xf32, #tpu.memory_space<vmem>>, %arg6: memref<1x16xf32, #tpu.memory_space<vmem>>, %arg7: memref<8x32xf32, #tpu.memory_space<vmem>>) attributes {dimension_semantics = [#tpu.dimension_semantics<parallel>], iteration_bounds = array<i64: 1>, scalar_prefetch = 0 : i64, scratch_operands = 0 : i64, tpu.core_type = #tpu.core_type<tc>, window_params = [{transform_indices = @transform_0, window_bounds = array<i64: 32, 64>}, {transform_indices = @transform_1, window_bounds = array<i64: 8, 4>}, {transform_indices = @transform_2, window_bounds = array<i64: 8, 4>}, {pipeline_mode = #tpu.pipeline_mode<synchronous>, transform_indices = @transform_3, window_bounds = array<i64: 64, 16>}, {pipeline_mode = #tpu.pipeline_mode<synchronous>, transform_indices = @transform_4, window_bounds = array<i64: 1, 16>}, {pipeline_mode = #tpu.pipeline_mode<synchronous>, transform_indices = @transform_5, window_bounds = array<i64: 1, 16>}, {transform_indices = @transform_6, window_bounds = array<i64: 8, 32>}]} {
    %c0 = arith.constant 0 : index
    %c0_0 = arith.constant 0 : index
    %0 = vector.load %arg1[%c0, %c0_0] : memref<32x64xf32, #tpu.memory_space<vmem>>, vector<32x64xf32>
    %1 = vector.extract_strided_slice %0 {offsets = [0, 0], sizes = [32, 32], strides = [1, 1]} : vector<32x64xf32> to vector<32x32xf32>
    %c0_1 = arith.constant 0 : index
    %c0_2 = arith.constant 0 : index
    %2 = vector.load %arg4[%c0_1, %c0_2] : memref<64x16xf32, #tpu.memory_space<vmem>>, vector<64x16xf32>
    %cst = arith.constant dense<0.000000e+00> : vector<32x16xf32>
    %3 = tpu.matmul %0, %2, %cst {dimension_numbers = #tpu.dot_dimension_numbers<[1], [0], [0], [1], [0, 0, 1, 1], [], []>} : vector<32x64xf32>, vector<64x16xf32>, vector<32x16xf32> -> vector<32x16xf32>
    %c0_3 = arith.constant 0 : index
    %c0_4 = arith.constant 0 : index
    %4 = vector.load %arg5[%c0_3, %c0_4] : memref<1x16xf32, #tpu.memory_space<vmem>>, vector<1x16xf32>
    %5 = vector.broadcast %4 : vector<1x16xf32> to vector<32x16xf32>
    %6 = arith.addf %3, %5 : vector<32x16xf32>
    %cst_5 = arith.constant 0.000000e+00 : f32
    %7 = vector.broadcast %cst_5 : f32 to vector<32x16xf32>
    %8 = arith.cmpf oge, %6, %7 : vector<32x16xf32>
    %cst_6 = arith.constant 0.00999999977 : f32
    %9 = vector.broadcast %cst_6 : f32 to vector<32x16xf32>
    %10 = arith.mulf %9, %6 : vector<32x16xf32>
    %11 = arith.select %8, %6, %10 : vector<32x16xi1>, vector<32x16xf32>
    %12 = vector.shape_cast %11 : vector<32x16xf32> to vector<8x4x16xf32>
    %c0_7 = arith.constant 0 : index
    %c0_8 = arith.constant 0 : index
    %13 = vector.load %arg6[%c0_7, %c0_8] : memref<1x16xf32, #tpu.memory_space<vmem>>, vector<1x16xf32>
    %14 = vector.shape_cast %13 : vector<1x16xf32> to vector<1x1x16xf32>
    %15 = vector.broadcast %14 : vector<1x1x16xf32> to vector<8x4x16xf32>
    %16 = arith.mulf %12, %15 : vector<8x4x16xf32>
    %cst_9 = arith.constant dense<0.000000e+00> : vector<8x4xf32>
    %17 = vector.multi_reduction <add>, %16, %cst_9 [2] : vector<8x4x16xf32> to vector<8x4xf32>
    %c0_10 = arith.constant 0 : index
    %c0_11 = arith.constant 0 : index
    %18 = vector.load %arg2[%c0_10, %c0_11] : memref<8x4xf32, #tpu.memory_space<vmem>>, vector<8x4xf32>
    %19 = arith.addf %17, %18 : vector<8x4xf32>
    %cst_12 = arith.constant dense<0xFF800000> : vector<8xf32>
    %20 = vector.multi_reduction <maximumf>, %19, %cst_12 [1] : vector<8x4xf32> to vector<8xf32>
    %21 = vector.shape_cast %20 : vector<8xf32> to vector<8x1xf32>
    %22 = vector.broadcast %21 : vector<8x1xf32> to vector<8x4xf32>
    %23 = arith.subf %19, %22 : vector<8x4xf32>
    %24 = math.exp %23 : vector<8x4xf32>
    %cst_13 = arith.constant dense<0.000000e+00> : vector<8xf32>
    %25 = vector.multi_reduction <add>, %24, %cst_13 [1] : vector<8x4xf32> to vector<8xf32>
    %26 = vector.shape_cast %25 : vector<8xf32> to vector<8x1xf32>
    %27 = vector.broadcast %26 : vector<8x1xf32> to vector<8x4xf32>
    %28 = arith.divf %24, %27 : vector<8x4xf32>
    %c0_14 = arith.constant 0 : index
    %c0_15 = arith.constant 0 : index
    %29 = vector.load %arg3[%c0_14, %c0_15] : memref<8x4xf32, #tpu.memory_space<vmem>>, vector<8x4xf32>
    %30 = arith.mulf %28, %29 : vector<8x4xf32>
    %31 = vector.shape_cast %1 : vector<32x32xf32> to vector<8x4x32xf32>
    %32 = vector.shape_cast %30 : vector<8x4xf32> to vector<8x4x1xf32>
    %33 = vector.broadcast %32 : vector<8x4x1xf32> to vector<8x4x32xf32>
    %34 = arith.mulf %31, %33 : vector<8x4x32xf32>
    %cst_16 = arith.constant dense<0.000000e+00> : vector<8x32xf32>
    %35 = vector.multi_reduction <add>, %34, %cst_16 [1] : vector<8x4x32xf32> to vector<8x32xf32>
    %c0_17 = arith.constant 0 : index
    %c0_18 = arith.constant 0 : index
    %36 = vector.load %arg7[%c0_17, %c0_18] : memref<8x32xf32, #tpu.memory_space<vmem>>, vector<8x32xf32>
    tpu.vector_store %arg7[%c0_17, %c0_18], %35 {strides = array<i32>} : memref<8x32xf32, #tpu.memory_space<vmem>>, vector<8x32xf32>,
    return
  }
  func.func @transform_0(%arg0: i32) -> (i32, i32) {
    %c0_i32 = arith.constant 0 : i32
    %c0_i32_0 = arith.constant 0 : i32
    return %arg0, %c0_i32 : i32, i32
  }
  func.func @transform_1(%arg0: i32) -> (i32, i32) {
    %c0_i32 = arith.constant 0 : i32
    %c0_i32_0 = arith.constant 0 : i32
    return %arg0, %c0_i32 : i32, i32
  }
  func.func @transform_2(%arg0: i32) -> (i32, i32) {
    %c0_i32 = arith.constant 0 : i32
    %c0_i32_0 = arith.constant 0 : i32
    return %arg0, %c0_i32 : i32, i32
  }
  func.func @transform_3(%arg0: i32) -> (i32, i32) {
    %c0_i32 = arith.constant 0 : i32
    %c0_i32_0 = arith.constant 0 : i32
    %c0_i32_1 = arith.constant 0 : i32
    return %c0_i32, %c0_i32_0 : i32, i32
  }
  func.func @transform_4(%arg0: i32) -> (i32, i32) {
    %c0_i32 = arith.constant 0 : i32
    %c0_i32_0 = arith.constant 0 : i32
    %c0_i32_1 = arith.constant 0 : i32
    return %c0_i32, %c0_i32_0 : i32, i32
  }
  func.func @transform_5(%arg0: i32) -> (i32, i32) {
    %c0_i32 = arith.constant 0 : i32
    %c0_i32_0 = arith.constant 0 : i32
    %c0_i32_1 = arith.constant 0 : i32
    return %c0_i32, %c0_i32_0 : i32, i32
  }
  func.func @transform_6(%arg0: i32) -> (i32, i32) {
    %c0_i32 = arith.constant 0 : i32
    %c0_i32_0 = arith.constant 0 : i32
    return %arg0, %c0_i32 : i32, i32
  }
}

module attributes {stable_mosaic.version = 11 : i64} {
  func.func @_leaf_attn_kernel(%arg0: i32, %arg1: memref<40x64xf32, #tpu.memory_space<vmem>>, %arg2: memref<8x5xf32, #tpu.memory_space<vmem>>, %arg3: memref<8x5xf32, #tpu.memory_space<vmem>>, %arg4: memref<64x16xf32, #tpu.memory_space<vmem>>, %arg5: memref<1x16xf32, #tpu.memory_space<vmem>>, %arg6: memref<1x16xf32, #tpu.memory_space<vmem>>, %arg7: memref<8x32xf32, #tpu.memory_space<vmem>>) attributes {dimension_semantics = [#tpu.dimension_semantics<parallel>], iteration_bounds = array<i64: 1>, scalar_prefetch = 0 : i64, scratch_operands = 0 : i64, tpu.core_type = #tpu.core_type<tc>, window_params = [{transform_indices = @transform_0, window_bounds = array<i64: 40, 64>}, {transform_indices = @transform_1, window_bounds = array<i64: 8, 5>}, {transform_indices = @transform_2, window_bounds = array<i64: 8, 5>}, {pipeline_mode = #tpu.pipeline_mode<synchronous>, transform_indices = @transform_3, window_bounds = array<i64: 64, 16>}, {pipeline_mode = #tpu.pipeline_mode<synchronous>, transform_indices = @transform_4, window_bounds = array<i64: 1, 16>}, {pipeline_mode = #tpu.pipeline_mode<synchronous>, transform_indices = @transform_5, window_bounds = array<i64: 1, 16>}, {transform_indices = @transform_6, window_bounds = array<i64: 8, 32>}]} {
    %c0 = arith.constant 0 : index
    %c0_0 = arith.constant 0 : index
    %0 = vector.load %arg1[%c0, %c0_0] : memref<40x64xf32, #tpu.memory_space<vmem>>, vector<40x64xf32>
    %1 = vector.extract_strided_slice %0 {offsets = [0, 0], sizes = [40, 32], strides = [1, 1]} : vector<40x64xf32> to vector<40x32xf32>
    %c0_1 = arith.constant 0 : index
    %c0_2 = arith.constant 0 : index
    %2 = vector.load %arg4[%c0_1, %c0_2] : memref<64x16xf32, #tpu.memory_space<vmem>>, vector<64x16xf32>
    %cst = arith.constant dense<0.000000e+00> : vector<40x16xf32>
    %3 = tpu.matmul %0, %2, %cst {dimension_numbers = #tpu.dot_dimension_numbers<[1], [0], [0], [1], [0, 0, 1, 1], [], []>} : vector<40x64xf32>, vector<64x16xf32>, vector<40x16xf32> -> vector<40x16xf32>
    %c0_3 = arith.constant 0 : index
    %c0_4 = arith.constant 0 : index
    %4 = vector.load %arg5[%c0_3, %c0_4] : memref<1x16xf32, #tpu.memory_space<vmem>>, vector<1x16xf32>
    %5 = vector.broadcast %4 : vector<1x16xf32> to vector<40x16xf32>
    %6 = arith.addf %3, %5 : vector<40x16xf32>
    %cst_5 = arith.constant 0.000000e+00 : f32
    %7 = vector.broadcast %cst_5 : f32 to vector<40x16xf32>
    %8 = arith.cmpf oge, %6, %7 : vector<40x16xf32>
    %cst_6 = arith.constant 0.00999999977 : f32
    %9 = vector.broadcast %cst_6 : f32 to vector<40x16xf32>
    %10 = arith.mulf %9, %6 : vector<40x16xf32>
    %11 = arith.select %8, %6, %10 : vector<40x16xi1>, vector<40x16xf32>
    %12 = vector.shape_cast %11 : vector<40x16xf32> to vector<8x5x16xf32>
    %c0_7 = arith.constant 0 : index
    %c0_8 = arith.constant 0 : index
    %13 = vector.load %arg6[%c0_7, %c0_8] : memref<1x16xf32, #tpu.memory_space<vmem>>, vector<1x16xf32>
    %14 = vector.shape_cast %13 : vector<1x16xf32> to vector<1x1x16xf32>
    %15 = vector.broadcast %14 : vector<1x1x16xf32> to vector<8x5x16xf32>
    %16 = arith.mulf %12, %15 : vector<8x5x16xf32>
    %cst_9 = arith.constant dense<0.000000e+00> : vector<8x5xf32>
    %17 = vector.multi_reduction <add>, %16, %cst_9 [2] : vector<8x5x16xf32> to vector<8x5xf32>
    %c0_10 = arith.constant 0 : index
    %c0_11 = arith.constant 0 : index
    %18 = vector.load %arg2[%c0_10, %c0_11] : memref<8x5xf32, #tpu.memory_space<vmem>>, vector<8x5xf32>
    %19 = arith.addf %17, %18 : vector<8x5xf32>
    %cst_12 = arith.constant dense<0xFF800000> : vector<8xf32>
    %20 = vector.multi_reduction <maximumf>, %19, %cst_12 [1] : vector<8x5xf32> to vector<8xf32>
    %21 = vector.shape_cast %20 : vector<8xf32> to vector<8x1xf32>
    %22 = vector.broadcast %21 : vector<8x1xf32> to vector<8x5xf32>
    %23 = arith.subf %19, %22 : vector<8x5xf32>
    %24 = math.exp %23 : vector<8x5xf32>
    %cst_13 = arith.constant dense<0.000000e+00> : vector<8xf32>
    %25 = vector.multi_reduction <add>, %24, %cst_13 [1] : vector<8x5xf32> to vector<8xf32>
    %26 = vector.shape_cast %25 : vector<8xf32> to vector<8x1xf32>
    %27 = vector.broadcast %26 : vector<8x1xf32> to vector<8x5xf32>
    %28 = arith.divf %24, %27 : vector<8x5xf32>
    %c0_14 = arith.constant 0 : index
    %c0_15 = arith.constant 0 : index
    %29 = vector.load %arg3[%c0_14, %c0_15] : memref<8x5xf32, #tpu.memory_space<vmem>>, vector<8x5xf32>
    %30 = arith.mulf %28, %29 : vector<8x5xf32>
    %31 = vector.shape_cast %1 : vector<40x32xf32> to vector<8x5x32xf32>
    %32 = vector.shape_cast %30 : vector<8x5xf32> to vector<8x5x1xf32>
    %33 = vector.broadcast %32 : vector<8x5x1xf32> to vector<8x5x32xf32>
    %34 = arith.mulf %31, %33 : vector<8x5x32xf32>
    %cst_16 = arith.constant dense<0.000000e+00> : vector<8x32xf32>
    %35 = vector.multi_reduction <add>, %34, %cst_16 [1] : vector<8x5x32xf32> to vector<8x32xf32>
    %c0_17 = arith.constant 0 : index
    %c0_18 = arith.constant 0 : index
    %36 = vector.load %arg7[%c0_17, %c0_18] : memref<8x32xf32, #tpu.memory_space<vmem>>, vector<8x32xf32>
    tpu.vector_store %arg7[%c0_17, %c0_18], %35 {strides = array<i32>} : memref<8x32xf32, #tpu.memory_space<vmem>>, vector<8x32xf32>,
    return
  }
  func.func @transform_0(%arg0: i32) -> (i32, i32) {
    %c0_i32 = arith.constant 0 : i32
    %c0_i32_0 = arith.constant 0 : i32
    return %arg0, %c0_i32 : i32, i32
  }
  func.func @transform_1(%arg0: i32) -> (i32, i32) {
    %c0_i32 = arith.constant 0 : i32
    %c0_i32_0 = arith.constant 0 : i32
    return %arg0, %c0_i32 : i32, i32
  }
  func.func @transform_2(%arg0: i32) -> (i32, i32) {
    %c0_i32 = arith.constant 0 : i32
    %c0_i32_0 = arith.constant 0 : i32
    return %arg0, %c0_i32 : i32, i32
  }
  func.func @transform_3(%arg0: i32) -> (i32, i32) {
    %c0_i32 = arith.constant 0 : i32
    %c0_i32_0 = arith.constant 0 : i32
    %c0_i32_1 = arith.constant 0 : i32
    return %c0_i32, %c0_i32_0 : i32, i32
  }
  func.func @transform_4(%arg0: i32) -> (i32, i32) {
    %c0_i32 = arith.constant 0 : i32
    %c0_i32_0 = arith.constant 0 : i32
    %c0_i32_1 = arith.constant 0 : i32
    return %c0_i32, %c0_i32_0 : i32, i32
  }
  func.func @transform_5(%arg0: i32) -> (i32, i32) {
    %c0_i32 = arith.constant 0 : i32
    %c0_i32_0 = arith.constant 0 : i32
    %c0_i32_1 = arith.constant 0 : i32
    return %c0_i32, %c0_i32_0 : i32, i32
  }
  func.func @transform_6(%arg0: i32) -> (i32, i32) {
    %c0_i32 = arith.constant 0 : i32
    %c0_i32_0 = arith.constant 0 : i32
    return %arg0, %c0_i32 : i32, i32
  }
}

</mosaic_0001>

<llo_original>
// kernel: leaf_attention_forward.2
$region0: #{leaf_attention_forward.2}
  #allocation0 [shape = 'u32[]', space=smem, size = 0x4, offset = 0x4, fixed_abs, tag = 'smem constant byte address 0x4 - core index']
  #allocation1 [shape = 'u32[144,128]{1,0:T(1,128)}', space=vmem, size = 0x12000, scoped, tag = 'internal scratch']
  %s0 = inlined_call_operand.vmem [shape: f32[32,64], index: 0, kind: input, shape index: {}]
  %s1 = inlined_call_operand.vmem [shape: f32[8,4], index: 1, kind: input, shape index: {}]
  %s2 = inlined_call_operand.vmem [shape: f32[8,4], index: 2, kind: input, shape index: {}]
  %s3 = inlined_call_operand.vmem [shape: f32[64,16], index: 3, kind: input, shape index: {}]
  %s4 = inlined_call_operand.vmem [shape: f32[1,16], index: 4, kind: input, shape index: {}]
  %s5 = inlined_call_operand.vmem [shape: f32[1,16], index: 5, kind: input, shape index: {}]
  %s6 = inlined_call_operand.vmem [shape: f32[8,32], index: 6, kind: output, shape index: {}]
  %s7 = sld [smem:[#allocation0]]
  $region34: #{leaf_attention_forward.2} parent=0
    _
  %s9 = ssub.s32 1, %s7
  %s10 = scalar_select 0, %s9, %s7
  // Predicated region
  $region2: #{leaf_attention_forward.2} parent=0 // pred_check
    _
  $region3: #{leaf_attention_forward.2} parent=0 // pred_check_branch
    %12 = sbr.rel (0) target = $region5
  $region4: #{leaf_attention_forward.2} parent=0 // pred_region
    _
  $region5: #{leaf_attention_forward.2} parent=0 // pred_fallthru
    _
  // Predicated region
  $region6: #{leaf_attention_forward.2} parent=0 // pred_check
    _
  $region7: #{leaf_attention_forward.2} parent=0 // pred_check_branch
    %14 = sbr.rel (0) target = $region9
  $region8: #{leaf_attention_forward.2} parent=0 // pred_region
    _
  $region9: #{leaf_attention_forward.2} parent=0 // pred_fallthru
    _
  // Predicated region
  $region10: #{leaf_attention_forward.2} parent=0 // pred_check
    _
  $region11: #{leaf_attention_forward.2} parent=0 // pred_check_branch
    %16 = sbr.rel (0) target = $region13
  $region12: #{leaf_attention_forward.2} parent=0 // pred_region
    _
  $region13: #{leaf_attention_forward.2} parent=0 // pred_fallthru
    _
  // Predicated region
  $region14: #{leaf_attention_forward.2} parent=0 // pred_check
    _
  $region15: #{leaf_attention_forward.2} parent=0 // pred_check_branch
    %18 = sbr.rel (0) target = $region17
  $region16: #{leaf_attention_forward.2} parent=0 // pred_region
    _
  $region17: #{leaf_attention_forward.2} parent=0 // pred_fallthru
    _
  // Predicated region
  $region18: #{leaf_attention_forward.2} parent=0 // pred_check
    _
  $region19: #{leaf_attention_forward.2} parent=0 // pred_check_branch
    %20 = sbr.rel (0) target = $region21
  $region20: #{leaf_attention_forward.2} parent=0 // pred_region
    _
  $region21: #{leaf_attention_forward.2} parent=0 // pred_fallthru
    _
  // Predicated region
  $region22: #{leaf_attention_forward.2} parent=0 // pred_check
    _
  $region23: #{leaf_attention_forward.2} parent=0 // pred_check_branch
    %22 = sbr.rel (0) target = $region25
  $region24: #{leaf_attention_forward.2} parent=0 // pred_region
    _
  $region25: #{leaf_attention_forward.2} parent=0 // pred_fallthru
    _
  %v23 = vld [vmem:[%s0] sm:$0xff]
  %v24 = vld [vmem:[%s0 + $0x8] sm:$0xff]
  %v25 = vld [vmem:[%s0 + $0x10] sm:$0xff]
  %v26 = vld [vmem:[%s0 + $0x18] sm:$0xff]
  %v27 = vld [vmem:[%s3] sm:$0xff]
  %v28 = vld [vmem:[%s3 + $0x8] sm:$0xff]
  %v29 = vld [vmem:[%s3 + $0x10] sm:$0xff]
  %v30 = vld [vmem:[%s3 + $0x18] sm:$0xff]
  %v31 = vld [vmem:[%s3 + $0x20] sm:$0xff]
  %v32 = vld [vmem:[%s3 + $0x28] sm:$0xff]
  %v33 = vld [vmem:[%s3 + $0x30] sm:$0xff]
  %v34 = vld [vmem:[%s3 + $0x38] sm:$0xff]
  %v35 = vld [vmem:[%s4] sm:$0x1]
  %v37 = vlaneseq
  %v38 = vshrl.u32 %v37, 7
  %v39 = vsub.s32 0, %v38
  %v40 = vrot.slane %v35, %v39
  %vm42 = vcmask 523264
  %v44 = vsel %vm42, %v23, 0
  %v47 = vsel %vm42, %v24, 0
  %v50 = vsel %vm42, %v25, 0
  %v53 = vsel %vm42, %v26, 0
  %55 = vmatprep.subr.mxu0 0.0
  %56 = vmatpush1.msra.mxu0 %v27
  %57 = vmatprep.subr.mxu0 0.0
  %58 = vmatpush1.msra.mxu0 %v28
  %59 = vmatprep.subr.mxu0 0.0
  %60 = vmatpush1.msra.mxu0 %v29
  %61 = vmatprep.subr.mxu0 0.0
  %62 = vmatpush1.msra.mxu0 %v30
  %63 = vmatprep.subr.mxu0 0.0
  %64 = vmatpush1.msra.mxu0 %v31
  %65 = vmatprep.subr.mxu0 0.0
  %66 = vmatpush1.msra.mxu0 %v32
  %67 = vmatprep.subr.mxu0 0.0
  %68 = vmatpush1.msra.mxu0 %v33
  %69 = vmatprep.subr.mxu0 0.0
  %70 = vmatpush1.msra.mxu0 %v34
  %71 = vmatprep.subr.mxu0 0.0
  %72 = vmatpush1.msra.mxu0 0.0
  %73 = vmatprep.subr.mxu0 0.0
  %74 = vmatpush1.msra.mxu0 0.0
  %75 = vmatprep.subr.mxu0 0.0
  %76 = vmatpush1.msra.mxu0 0.0
  %77 = vmatprep.subr.mxu0 0.0
  %78 = vmatpush1.msra.mxu0 0.0
  %79 = vmatprep.subr.mxu0 0.0
  %80 = vmatpush1.msra.mxu0 0.0
  %81 = vmatprep.subr.mxu0 0.0
  %82 = vmatpush1.msra.mxu0 0.0
  %83 = vmatprep.subr.mxu0 0.0
  %84 = vmatpush1.msra.mxu0 0.0
  %85 = vmatprep.subr.mxu0 0.0
  %86 = vmatpush1.msra.mxu0 0.0
  %87 = vmatprep.subr.mxu0 0.0
  %88 = vmatpush1.msra.mxu0 0.0
  %89 = vmatprep.subr.mxu0 0.0
  %90 = vmatpush1.msra.mxu0 0.0
  %91 = vmatprep.subr.mxu0 0.0
  %92 = vmatpush1.msra.mxu0 0.0
  %93 = vmatprep.subr.mxu0 0.0
  %94 = vmatpush1.msra.mxu0 0.0
  %95 = vmatprep.subr.mxu0 0.0
  %96 = vmatpush1.msra.mxu0 0.0
  %97 = vmatprep.subr.mxu0 0.0
  %98 = vmatpush1.msra.mxu0 0.0
  %99 = vmatprep.subr.mxu0 0.0
  %100 = vmatpush1.msra.mxu0 0.0
  %101 = vmatprep.subr.mxu0 0.0
  %102 = vmatpush1.msra.mxu0 0.0
  %103 = vmatprep.subr.mxu0 0.0
  %104 = vmatpush1.msra.mxu0 0.0
  %105 = vmatprep.subr.mxu0 0.0
  %106 = vmatpush1.msra.mxu0 0.0
  %107 = vmatprep.subr.mxu0 0.0
  %108 = vmatpush1.msra.mxu0 0.0
  %109 = vmatprep.subr.mxu0 0.0
  %110 = vmatpush1.msra.mxu0 0.0
  %111 = vmatprep.subr.mxu0 0.0
  %112 = vmatpush1.msra.mxu0 0.0
  %113 = vmatprep.subr.mxu0 0.0
  %114 = vmatpush1.msra.mxu0 0.0
  %115 = vmatprep.subr.mxu0 0.0
  %116 = vmatpush1.msra.mxu0 0.0
  %117 = vmatprep.subr.mxu0 0.0
  %118 = vmatpush1.msra.mxu0 0.0
  %119 = vmatprep.mubr.f32.mxu0 0.0
  %120 = vmatmul.mubr.f32.gmra.mrb[0].mxu0 %v44
  %v121 = vpop.f32.mrb[0].mxu0
  %v122 = vadd.f32 %v40, %v121
  %v123 = vpop.f32.mrb[0].mxu0
  %124 = vmatprep.mubr.f32.mxu0 0.0
  %125 = vmatmul.mubr.f32.gmra.mrb[0].mxu0 %v47
  %v126 = vpop.f32.mrb[0].mxu0
  %v127 = vadd.f32 %v40, %v126
  %v128 = vpop.f32.mrb[0].mxu0
  %129 = vmatprep.mubr.f32.mxu0 0.0
  %130 = vmatmul.mubr.f32.gmra.mrb[0].mxu0 %v50
  %v131 = vpop.f32.mrb[0].mxu0
  %v132 = vadd.f32 %v40, %v131
  %v133 = vpop.f32.mrb[0].mxu0
  %134 = vmatprep.mubr.f32.mxu0 0.0
  %135 = vmatmul.mubr.f32.gmra.mrb[0].mxu0 %v53
  %v136 = vpop.f32.mrb[0].mxu0
  %v137 = vadd.f32 %v40, %v136
  %v138 = vpop.f32.mrb[0].mxu0
  %139 = vdwg.mxu0
  %vm140 = vcmp.ge.f32.partialorder %v122, 0.0
  %vm141 = vcmp.ge.f32.partialorder %v127, 0.0
  %vm142 = vcmp.ge.f32.partialorder %v132, 0.0
  %vm143 = vcmp.ge.f32.partialorder %v137, 0.0
  %v144 = vmul.f32 %v122, 0.01
  %v145 = vmul.f32 %v127, 0.01
  %v146 = vmul.f32 %v132, 0.01
  %v147 = vmul.f32 %v137, 0.01
  %v148 = vsel %vm140, %v122, %v144
  %v149 = vsel %vm141, %v127, %v145
  %v150 = vsel %vm142, %v132, %v146
  %v151 = vsel %vm143, %v137, %v147
  %v156 = vcombine.high %v148, %v148
  %v157 = vcombine.high %v149, %v149
  %v158 = vcombine.high %v150, %v150
  %v159 = vcombine.high %v151, %v151
  %v164 = vld [vmem:[%s5] sm:$0x1]
  %v166 = vlaneseq
  %v167 = vshrl.u32 %v166, 7
  %v168 = vsub.s32 0, %v167
  %v169 = vrot.slane %v164, %v168
  %v171 = vmul.f32 %v148, %v169
  %v172 = vmul.f32 %v156, %v169
  %v173 = vmul.f32 %v149, %v169
  %v174 = vmul.f32 %v157, %v169
  %v175 = vmul.f32 %v150, %v169
  %v176 = vmul.f32 %v158, %v169
  %v177 = vmul.f32 %v151, %v169
  %v178 = vmul.f32 %v159, %v169
  %vm179 = vcmask 125952
  %v180 = vsel %vm179, %v171, 0.0
  %181 = vadd.xlane.f32.xlu0 %v180
  %v182 = vpop.xlane.xlu0 %181
  %v183 = vsel %vm179, %v172, 0.0
  %184 = vadd.xlane.f32.xlu0 %v183
  %v185 = vpop.xlane.xlu0 %184
  %v186 = vsel %vm179, %v173, 0.0
  %187 = vadd.xlane.f32.xlu0 %v186
  %v188 = vpop.xlane.xlu0 %187
  %v189 = vsel %vm179, %v174, 0.0
  %190 = vadd.xlane.f32.xlu0 %v189
  %v191 = vpop.xlane.xlu0 %190
  %v192 = vsel %vm179, %v175, 0.0
  %193 = vadd.xlane.f32.xlu0 %v192
  %v194 = vpop.xlane.xlu0 %193
  %v195 = vsel %vm179, %v176, 0.0
  %196 = vadd.xlane.f32.xlu0 %v195
  %v197 = vpop.xlane.xlu0 %196
  %v198 = vsel %vm179, %v177, 0.0
  %199 = vadd.xlane.f32.xlu0 %v198
  %v200 = vpop.xlane.xlu0 %199
  %v201 = vsel %vm179, %v178, 0.0
  %202 = vadd.xlane.f32.xlu0 %v201
  %v203 = vpop.xlane.xlu0 %202
  %v204 = vld [vmem:[%s1] sm:$0xff]
  %v206 = vlaneseq
  %v207 = vshrl.u32 %v206, 7
  %v208 = vsub.s32 0, %v207
  %v209 = vrot.slane %v204, %v208
  %211 = vbcast.lane.b32.xlu0 %v209, 256
  %v212 = vpop.permute.xlu0 %211
  %v213 = vlaneseq
  %v214 = vshrl.u32 %v213, 7
  %v215 = vsub.s32 1, %v214
  %v216 = vrot.slane %v204, %v215
  %218 = vbcast.lane.b32.xlu0 %v216, 256
  %v219 = vpop.permute.xlu0 %218
  %v220 = vlaneseq
  %v221 = vshrl.u32 %v220, 7
  %v222 = vsub.s32 2, %v221
  %v223 = vrot.slane %v204, %v222
  %225 = vbcast.lane.b32.xlu0 %v223, 256
  %v226 = vpop.permute.xlu0 %225
  %v227 = vlaneseq
  %v228 = vshrl.u32 %v227, 7
  %v229 = vsub.s32 3, %v228
  %v230 = vrot.slane %v204, %v229
  %232 = vbcast.lane.b32.xlu0 %v230, 256
  %v233 = vpop.permute.xlu0 %232
  %v234 = vlaneseq
  %v235 = vshrl.u32 %v234, 7
  %v236 = vsub.s32 4, %v235
  %v237 = vrot.slane %v204, %v236
  %239 = vbcast.lane.b32.xlu0 %v237, 256
  %v240 = vpop.permute.xlu0 %239
  %v241 = vlaneseq
  %v242 = vshrl.u32 %v241, 7
  %v243 = vsub.s32 5, %v242
  %v244 = vrot.slane %v204, %v243
  %246 = vbcast.lane.b32.xlu0 %v244, 256
  %v247 = vpop.permute.xlu0 %246
  %v248 = vlaneseq
  %v249 = vshrl.u32 %v248, 7
  %v250 = vsub.s32 6, %v249
  %v251 = vrot.slane %v204, %v250
  %253 = vbcast.lane.b32.xlu0 %v251, 256
  %v254 = vpop.permute.xlu0 %253
  %v255 = vlaneseq
  %v256 = vshrl.u32 %v255, 7
  %v257 = vsub.s32 7, %v256
  %v258 = vrot.slane %v204, %v257
  %260 = vbcast.lane.b32.xlu0 %v258, 256
  %v261 = vpop.permute.xlu0 %260
  %v270 = vadd.f32 %v182, %v212
  %v271 = vadd.f32 %v185, %v219
  %v272 = vadd.f32 %v188, %v226
  %v273 = vadd.f32 %v191, %v233
  %v274 = vadd.f32 %v194, %v240
  %v275 = vadd.f32 %v197, %v247
  %v276 = vadd.f32 %v200, %v254
  %v277 = vadd.f32 %v203, %v261
  %286 = vset.pattern.permute.xlu0 0
  %287 = vperm.xlu0 %286, %v270
  %v288 = vpop.permute.xlu0 %287
  %289 = vset.pattern.permute.xlu0 0
  %290 = vperm.xlu0 %289, %v271
  %v291 = vpop.permute.xlu0 %290
  %292 = vset.pattern.permute.xlu0 0
  %293 = vperm.xlu0 %292, %v272
  %v294 = vpop.permute.xlu0 %293
  %295 = vset.pattern.permute.xlu0 0
  %296 = vperm.xlu0 %295, %v273
  %v297 = vpop.permute.xlu0 %296
  %298 = vset.pattern.permute.xlu0 0
  %299 = vperm.xlu0 %298, %v274
  %v300 = vpop.permute.xlu0 %299
  %301 = vset.pattern.permute.xlu0 0
  %302 = vperm.xlu0 %301, %v275
  %v303 = vpop.permute.xlu0 %302
  %304 = vset.pattern.permute.xlu0 0
  %305 = vperm.xlu0 %304, %v276
  %v306 = vpop.permute.xlu0 %305
  %307 = vset.pattern.permute.xlu0 0
  %308 = vperm.xlu0 %307, %v277
  %v309 = vpop.permute.xlu0 %308
  %v310 = vlaneseq
  %v311 = vand.u32 %v310, 127
  %v312 = vlaneseq
  %v313 = vshrl.u32 %v312, 7
  %v314 = vsub.s32 %v311, %v313
  %v315 = vrot.slane %v288, %v314
  %v316 = vlaneseq
  %v317 = vshrl.u32 %v316, 7
  %v318 = vsub.s32 %v311, %v317
  %v319 = vrot.slane %v291, %v318
  %v320 = vlaneseq
  %v321 = vshrl.u32 %v320, 7
  %v322 = vsub.s32 %v311, %v321
  %v323 = vrot.slane %v294, %v322
  %v324 = vlaneseq
  %v325 = vshrl.u32 %v324, 7
  %v326 = vsub.s32 %v311, %v325
  %v327 = vrot.slane %v297, %v326
  %v328 = vlaneseq
  %v329 = vshrl.u32 %v328, 7
  %v330 = vsub.s32 %v311, %v329
  %v331 = vrot.slane %v300, %v330
  %v332 = vlaneseq
  %v333 = vshrl.u32 %v332, 7
  %v334 = vsub.s32 %v311, %v333
  %v335 = vrot.slane %v303, %v334
  %v336 = vlaneseq
  %v337 = vshrl.u32 %v336, 7
  %v338 = vsub.s32 %v311, %v337
  %v339 = vrot.slane %v306, %v338
  %v340 = vlaneseq
  %v341 = vshrl.u32 %v340, 7
  %v342 = vsub.s32 %v311, %v341
  %v343 = vrot.slane %v309, %v342
  %vm344 = vcmask 1041409
  %v345 = vsel %vm344, %v319, %v315
  %vm346 = vcmask 1042434
  %v347 = vsel %vm346, %v323, %v345
  %vm348 = vcmask 1043459
  %v349 = vsel %vm348, %v327, %v347
  %vm350 = vcmask 1044484
  %v351 = vsel %vm350, %v331, %v349
  %vm352 = vcmask 1045509
  %v353 = vsel %vm352, %v335, %v351
  %vm354 = vcmask 1046534
  %v355 = vsel %vm354, %v339, %v353
  %vm356 = vcmask 1047559
  %v357 = vsel %vm356, %v343, %v355
  %vm359 = vcmask 31744
  %v360 = vsel %vm359, %v357, -inf
  %361 = vmax.xlane.f32.xlu0 %v360
  %v362 = vpop.xlane.xlu0 %361
  %v364 = vlaneseq
  %v365 = vshrl.u32 %v364, 7
  %v366 = vsub.s32 0, %v365
  %v367 = vrot.slane %v362, %v366
  %v368 = vlaneseq
  %v369 = vshrl.u32 %v368, 7
  %v370 = vsub.s32 1, %v369
  %v371 = vrot.slane %v362, %v370
  %v372 = vlaneseq
  %v373 = vshrl.u32 %v372, 7
  %v374 = vsub.s32 2, %v373
  %v375 = vrot.slane %v362, %v374
  %v376 = vlaneseq
  %v377 = vshrl.u32 %v376, 7
  %v378 = vsub.s32 3, %v377
  %v379 = vrot.slane %v362, %v378
  %v380 = vlaneseq
  %v381 = vshrl.u32 %v380, 7
  %v382 = vsub.s32 4, %v381
  %v383 = vrot.slane %v362, %v382
  %v384 = vlaneseq
  %v385 = vshrl.u32 %v384, 7
  %v386 = vsub.s32 5, %v385
  %v387 = vrot.slane %v362, %v386
  %v388 = vlaneseq
  %v389 = vshrl.u32 %v388, 7
  %v390 = vsub.s32 6, %v389
  %v391 = vrot.slane %v362, %v390
  %v392 = vlaneseq
  %v393 = vshrl.u32 %v392, 7
  %v394 = vsub.s32 7, %v393
  %v395 = vrot.slane %v362, %v394
  %v404 = vsub.f32 %v270, %v367
  %v405 = vsub.f32 %v271, %v371
  %v406 = vsub.f32 %v272, %v375
  %v407 = vsub.f32 %v273, %v379
  %v408 = vsub.f32 %v274, %v383
  %v409 = vsub.f32 %v275, %v387
  %v410 = vsub.f32 %v276, %v391
  %v411 = vsub.f32 %v277, %v395
  %v412 = vmul.f32 %v404, 1.442695
  %v413 = vpow.pop %v412
  %v414 = vmul.f32 %v405, 1.442695
  %v415 = vpow.pop %v414
  %v416 = vmul.f32 %v406, 1.442695
  %v417 = vpow.pop %v416
  %v418 = vmul.f32 %v407, 1.442695
  %v419 = vpow.pop %v418
  %v420 = vmul.f32 %v408, 1.442695
  %v421 = vpow.pop %v420
  %v422 = vmul.f32 %v409, 1.442695
  %v423 = vpow.pop %v422
  %v424 = vmul.f32 %v410, 1.442695
  %v425 = vpow.pop %v424
  %v426 = vmul.f32 %v411, 1.442695
  %v427 = vpow.pop %v426
  %436 = vset.pattern.permute.xlu0 0
  %437 = vperm.xlu0 %436, %v413
  %v438 = vpop.permute.xlu0 %437
  %439 = vset.pattern.permute.xlu0 0
  %440 = vperm.xlu0 %439, %v415
  %v441 = vpop.permute.xlu0 %440
  %442 = vset.pattern.permute.xlu0 0
  %443 = vperm.xlu0 %442, %v417
  %v444 = vpop.permute.xlu0 %443
  %445 = vset.pattern.permute.xlu0 0
  %446 = vperm.xlu0 %445, %v419
  %v447 = vpop.permute.xlu0 %446
  %448 = vset.pattern.permute.xlu0 0
  %449 = vperm.xlu0 %448, %v421
  %v450 = vpop.permute.xlu0 %449
  %451 = vset.pattern.permute.xlu0 0
  %452 = vperm.xlu0 %451, %v423
  %v453 = vpop.permute.xlu0 %452
  %454 = vset.pattern.permute.xlu0 0
  %455 = vperm.xlu0 %454, %v425
  %v456 = vpop.permute.xlu0 %455
  %457 = vset.pattern.permute.xlu0 0
  %458 = vperm.xlu0 %457, %v427
  %v459 = vpop.permute.xlu0 %458
  %v460 = vlaneseq
  %v461 = vshrl.u32 %v460, 7
  %v462 = vsub.s32 %v311, %v461
  %v463 = vrot.slane %v438, %v462
  %v464 = vlaneseq
  %v465 = vshrl.u32 %v464, 7
  %v466 = vsub.s32 %v311, %v465
  %v467 = vrot.slane %v441, %v466
  %v468 = vlaneseq
  %v469 = vshrl.u32 %v468, 7
  %v470 = vsub.s32 %v311, %v469
  %v471 = vrot.slane %v444, %v470
  %v472 = vlaneseq
  %v473 = vshrl.u32 %v472, 7
  %v474 = vsub.s32 %v311, %v473
  %v475 = vrot.slane %v447, %v474
  %v476 = vlaneseq
  %v477 = vshrl.u32 %v476, 7
  %v478 = vsub.s32 %v311, %v477
  %v479 = vrot.slane %v450, %v478
  %v480 = vlaneseq
  %v481 = vshrl.u32 %v480, 7
  %v482 = vsub.s32 %v311, %v481
  %v483 = vrot.slane %v453, %v482
  %v484 = vlaneseq
  %v485 = vshrl.u32 %v484, 7
  %v486 = vsub.s32 %v311, %v485
  %v487 = vrot.slane %v456, %v486
  %v488 = vlaneseq
  %v489 = vshrl.u32 %v488, 7
  %v490 = vsub.s32 %v311, %v489
  %v491 = vrot.slane %v459, %v490
  %v492 = vsel %vm344, %v467, %v463
  %v493 = vsel %vm346, %v471, %v492
  %v494 = vsel %vm348, %v475, %v493
  %v495 = vsel %vm350, %v479, %v494
  %v496 = vsel %vm352, %v483, %v495
  %v497 = vsel %vm354, %v487, %v496
  %v498 = vsel %vm356, %v491, %v497
  %v500 = vsel %vm359, %v498, 0.0
  %501 = vadd.xlane.f32.xlu0 %v500
  %v502 = vpop.xlane.xlu0 %501
  %v504 = vlaneseq
  %v505 = vshrl.u32 %v504, 7
  %v506 = vsub.s32 0, %v505
  %v507 = vrot.slane %v502, %v506
  %v508 = vlaneseq
  %v509 = vshrl.u32 %v508, 7
  %v510 = vsub.s32 1, %v509
  %v511 = vrot.slane %v502, %v510
  %v512 = vlaneseq
  %v513 = vshrl.u32 %v512, 7
  %v514 = vsub.s32 2, %v513
  %v515 = vrot.slane %v502, %v514
  %v516 = vlaneseq
  %v517 = vshrl.u32 %v516, 7
  %v518 = vsub.s32 3, %v517
  %v519 = vrot.slane %v502, %v518
  %v520 = vlaneseq
  %v521 = vshrl.u32 %v520, 7
  %v522 = vsub.s32 4, %v521
  %v523 = vrot.slane %v502, %v522
  %v524 = vlaneseq
  %v525 = vshrl.u32 %v524, 7
  %v526 = vsub.s32 5, %v525
  %v527 = vrot.slane %v502, %v526
  %v528 = vlaneseq
  %v529 = vshrl.u32 %v528, 7
  %v530 = vsub.s32 6, %v529
  %v531 = vrot.slane %v502, %v530
  %v532 = vlaneseq
  %v533 = vshrl.u32 %v532, 7
  %v534 = vsub.s32 7, %v533
  %v535 = vrot.slane %v502, %v534
  %v544 = vrcp.pop %v507
  %v545 = vmul.f32 %v413, %v544
  %v546 = vrcp.pop %v511
  %v547 = vmul.f32 %v415, %v546
  %v548 = vrcp.pop %v515
  %v549 = vmul.f32 %v417, %v548
  %v550 = vrcp.pop %v519
  %v551 = vmul.f32 %v419, %v550
  %v552 = vrcp.pop %v523
  %v553 = vmul.f32 %v421, %v552
  %v554 = vrcp.pop %v527
  %v555 = vmul.f32 %v423, %v554
  %v556 = vrcp.pop %v531
  %v557 = vmul.f32 %v425, %v556
  %v558 = vrcp.pop %v535
  %v559 = vmul.f32 %v427, %v558
  %v560 = vld [vmem:[%s2] sm:$0xff]
  %v562 = vlaneseq
  %v563 = vshrl.u32 %v562, 7
  %v564 = vsub.s32 0, %v563
  %v565 = vrot.slane %v560, %v564
  %567 = vbcast.lane.b32.xlu0 %v565, 256
  %v568 = vpop.permute.xlu0 %567
  %v569 = vlaneseq
  %v570 = vshrl.u32 %v569, 7
  %v571 = vsub.s32 1, %v570
  %v572 = vrot.slane %v560, %v571
  %574 = vbcast.lane.b32.xlu0 %v572, 256
  %v575 = vpop.permute.xlu0 %574
  %v576 = vlaneseq
  %v577 = vshrl.u32 %v576, 7
  %v578 = vsub.s32 2, %v577
  %v579 = vrot.slane %v560, %v578
  %581 = vbcast.lane.b32.xlu0 %v579, 256
  %v582 = vpop.permute.xlu0 %581
  %v583 = vlaneseq
  %v584 = vshrl.u32 %v583, 7
  %v585 = vsub.s32 3, %v584
  %v586 = vrot.slane %v560, %v585
  %588 = vbcast.lane.b32.xlu0 %v586, 256
  %v589 = vpop.permute.xlu0 %588
  %v590 = vlaneseq
  %v591 = vshrl.u32 %v590, 7
  %v592 = vsub.s32 4, %v591
  %v593 = vrot.slane %v560, %v592
  %595 = vbcast.lane.b32.xlu0 %v593, 256
  %v596 = vpop.permute.xlu0 %595
  %v597 = vlaneseq
  %v598 = vshrl.u32 %v597, 7
  %v599 = vsub.s32 5, %v598
  %v600 = vrot.slane %v560, %v599
  %602 = vbcast.lane.b32.xlu0 %v600, 256
  %v603 = vpop.permute.xlu0 %602
  %v604 = vlaneseq
  %v605 = vshrl.u32 %v604, 7
  %v606 = vsub.s32 6, %v605
  %v607 = vrot.slane %v560, %v606
  %609 = vbcast.lane.b32.xlu0 %v607, 256
  %v610 = vpop.permute.xlu0 %609
  %v611 = vlaneseq
  %v612 = vshrl.u32 %v611, 7
  %v613 = vsub.s32 7, %v612
  %v614 = vrot.slane %v560, %v613
  %616 = vbcast.lane.b32.xlu0 %v614, 256
  %v617 = vpop.permute.xlu0 %616
  %v626 = vmul.f32 %v545, %v568
  %v627 = vmul.f32 %v547, %v575
  %v628 = vmul.f32 %v549, %v582
  %v629 = vmul.f32 %v551, %v589
  %v630 = vmul.f32 %v553, %v596
  %v631 = vmul.f32 %v555, %v603
  %v632 = vmul.f32 %v557, %v610
  %v633 = vmul.f32 %v559, %v617
  %v634 = vcombine.high %v23, %v23
  %v635 = vcombine.high %v24, %v24
  %v636 = vcombine.high %v25, %v25
  %v637 = vcombine.high %v26, %v26
  %643 = vset.pattern.permute.xlu0 0
  %644 = vperm.xlu0 %643, %v626
  %v645 = vpop.permute.xlu0 %644
  %648 = vset.pattern.permute.xlu0 0
  %649 = vperm.xlu0 %648, %v627
  %v650 = vpop.permute.xlu0 %649
  %653 = vset.pattern.permute.xlu0 0
  %654 = vperm.xlu0 %653, %v628
  %v655 = vpop.permute.xlu0 %654
  %658 = vset.pattern.permute.xlu0 0
  %659 = vperm.xlu0 %658, %v629
  %v660 = vpop.permute.xlu0 %659
  %663 = vset.pattern.permute.xlu0 0
  %664 = vperm.xlu0 %663, %v630
  %v665 = vpop.permute.xlu0 %664
  %668 = vset.pattern.permute.xlu0 0
  %669 = vperm.xlu0 %668, %v631
  %v670 = vpop.permute.xlu0 %669
  %673 = vset.pattern.permute.xlu0 0
  %674 = vperm.xlu0 %673, %v632
  %v675 = vpop.permute.xlu0 %674
  %678 = vset.pattern.permute.xlu0 0
  %679 = vperm.xlu0 %678, %v633
  %v680 = vpop.permute.xlu0 %679
  %v682 = vmul.f32 %v23, %v645
  %v683 = vmul.f32 %v634, %v650
  %v684 = vmul.f32 %v24, %v655
  %v685 = vmul.f32 %v635, %v660
  %v686 = vmul.f32 %v25, %v665
  %v687 = vmul.f32 %v636, %v670
  %v688 = vmul.f32 %v26, %v675
  %v689 = vmul.f32 %v637, %v680
  %vm690 = vcmask 257024
  %v691 = vsel %vm690, %v682, 0.0
  %v692 = vrot.slane %v691, 4
  %v693 = vadd.f32 %v691, %v692
  %v694 = vrot.slane %v693, 2
  %v695 = vadd.f32 %v693, %v694
  %v696 = vrot.slane %v695, 1
  %v697 = vadd.f32 %v695, %v696
  %v698 = vsel %vm690, %v683, 0.0
  %v699 = vrot.slane %v698, 4
  %v700 = vadd.f32 %v698, %v699
  %v701 = vrot.slane %v700, 2
  %v702 = vadd.f32 %v700, %v701
  %v703 = vrot.slane %v702, 1
  %v704 = vadd.f32 %v702, %v703
  %v705 = vsel %vm690, %v684, 0.0
  %v706 = vrot.slane %v705, 4
  %v707 = vadd.f32 %v705, %v706
  %v708 = vrot.slane %v707, 2
  %v709 = vadd.f32 %v707, %v708
  %v710 = vrot.slane %v709, 1
  %v711 = vadd.f32 %v709, %v710
  %v712 = vsel %vm690, %v685, 0.0
  %v713 = vrot.slane %v712, 4
  %v714 = vadd.f32 %v712, %v713
  %v715 = vrot.slane %v714, 2
  %v716 = vadd.f32 %v714, %v715
  %v717 = vrot.slane %v716, 1
  %v718 = vadd.f32 %v716, %v717
  %v719 = vsel %vm690, %v686, 0.0
  %v720 = vrot.slane %v719, 4
  %v721 = vadd.f32 %v719, %v720
  %v722 = vrot.slane %v721, 2
  %v723 = vadd.f32 %v721, %v722
  %v724 = vrot.slane %v723, 1
  %v725 = vadd.f32 %v723, %v724
  %v726 = vsel %vm690, %v687, 0.0
  %v727 = vrot.slane %v726, 4
  %v728 = vadd.f32 %v726, %v727
  %v729 = vrot.slane %v728, 2
  %v730 = vadd.f32 %v728, %v729
  %v731 = vrot.slane %v730, 1
  %v732 = vadd.f32 %v730, %v731
  %v733 = vsel %vm690, %v688, 0.0
  %v734 = vrot.slane %v733, 4
  %v735 = vadd.f32 %v733, %v734
  %v736 = vrot.slane %v735, 2
  %v737 = vadd.f32 %v735, %v736
  %v738 = vrot.slane %v737, 1
  %v739 = vadd.f32 %v737, %v738
  %v740 = vsel %vm690, %v689, 0.0
  %v741 = vrot.slane %v740, 4
  %v742 = vadd.f32 %v740, %v741
  %v743 = vrot.slane %v742, 2
  %v744 = vadd.f32 %v742, %v743
  %v745 = vrot.slane %v744, 1
  %v746 = vadd.f32 %v744, %v745
  %v755 = vsel %vm344, %v704, %v697
  %v756 = vsel %vm346, %v711, %v755
  %v757 = vsel %vm348, %v718, %v756
  %v758 = vsel %vm350, %v725, %v757
  %v759 = vsel %vm352, %v732, %v758
  %v760 = vsel %vm354, %v739, %v759
  %v761 = vsel %vm356, %v746, %v760
  %vm763 = vcmask 261120
  %764 = vst.msk [vmem:[%s6] sm:$0xff] %vm763, %v761
  // Predicated region
  $region26: #{leaf_attention_forward.2} parent=0 // pred_check
    _
  $region27: #{leaf_attention_forward.2} parent=0 // pred_check_branch
    %766 = sbr.rel (0) target = $region29
  $region28: #{leaf_attention_forward.2} parent=0 // pred_region
    _
  $region29: #{leaf_attention_forward.2} parent=0 // pred_fallthru
    _
  // Predicated region
  $region30: #{leaf_attention_forward.2} parent=0 // pred_check
    _
  $region31: #{leaf_attention_forward.2} parent=0 // pred_check_branch
    %768 = sbr.rel (0) target = $region33
  $region32: #{leaf_attention_forward.2} parent=0 // pred_region
    _
  $region33: #{leaf_attention_forward.2} parent=0 // pred_fallthru
    _

// kernel: leaf_attention_forward.3
$region0: #{leaf_attention_forward.3}
  #allocation0 [shape = 'u32[]', space=smem, size = 0x4, offset = 0x4, fixed_abs, tag = 'smem constant byte address 0x4 - core index']
  #allocation1 [shape = 'u32[144,128]{1,0:T(1,128)}', space=vmem, size = 0x12000, scoped, tag = 'internal scratch']
  %s0 = inlined_call_operand.vmem [shape: f32[40,64], index: 0, kind: input, shape index: {}]
  %s1 = inlined_call_operand.vmem [shape: f32[8,5], index: 1, kind: input, shape index: {}]
  %s2 = inlined_call_operand.vmem [shape: f32[8,5], index: 2, kind: input, shape index: {}]
  %s3 = inlined_call_operand.vmem [shape: f32[64,16], index: 3, kind: input, shape index: {}]
  %s4 = inlined_call_operand.vmem [shape: f32[1,16], index: 4, kind: input, shape index: {}]
  %s5 = inlined_call_operand.vmem [shape: f32[1,16], index: 5, kind: input, shape index: {}]
  %s6 = inlined_call_operand.vmem [shape: f32[8,32], index: 6, kind: output, shape index: {}]
  %s7 = sld [smem:[#allocation0]]
  $region34: #{leaf_attention_forward.3} parent=0
    _
  %s9 = ssub.s32 1, %s7
  %s10 = scalar_select 0, %s9, %s7
  // Predicated region
  $region2: #{leaf_attention_forward.3} parent=0 // pred_check
    _
  $region3: #{leaf_attention_forward.3} parent=0 // pred_check_branch
    %12 = sbr.rel (0) target = $region5
  $region4: #{leaf_attention_forward.3} parent=0 // pred_region
    _
  $region5: #{leaf_attention_forward.3} parent=0 // pred_fallthru
    _
  // Predicated region
  $region6: #{leaf_attention_forward.3} parent=0 // pred_check
    _
  $region7: #{leaf_attention_forward.3} parent=0 // pred_check_branch
    %14 = sbr.rel (0) target = $region9
  $region8: #{leaf_attention_forward.3} parent=0 // pred_region
    _
  $region9: #{leaf_attention_forward.3} parent=0 // pred_fallthru
    _
  // Predicated region
  $region10: #{leaf_attention_forward.3} parent=0 // pred_check
    _
  $region11: #{leaf_attention_forward.3} parent=0 // pred_check_branch
    %16 = sbr.rel (0) target = $region13
  $region12: #{leaf_attention_forward.3} parent=0 // pred_region
    _
  $region13: #{leaf_attention_forward.3} parent=0 // pred_fallthru
    _
  // Predicated region
  $region14: #{leaf_attention_forward.3} parent=0 // pred_check
    _
  $region15: #{leaf_attention_forward.3} parent=0 // pred_check_branch
    %18 = sbr.rel (0) target = $region17
  $region16: #{leaf_attention_forward.3} parent=0 // pred_region
    _
  $region17: #{leaf_attention_forward.3} parent=0 // pred_fallthru
    _
  // Predicated region
  $region18: #{leaf_attention_forward.3} parent=0 // pred_check
    _
  $region19: #{leaf_attention_forward.3} parent=0 // pred_check_branch
    %20 = sbr.rel (0) target = $region21
  $region20: #{leaf_attention_forward.3} parent=0 // pred_region
    _
  $region21: #{leaf_attention_forward.3} parent=0 // pred_fallthru
    _
  // Predicated region
  $region22: #{leaf_attention_forward.3} parent=0 // pred_check
    _
  $region23: #{leaf_attention_forward.3} parent=0 // pred_check_branch
    %22 = sbr.rel (0) target = $region25
  $region24: #{leaf_attention_forward.3} parent=0 // pred_region
    _
  $region25: #{leaf_attention_forward.3} parent=0 // pred_fallthru
    _
  %v23 = vld [vmem:[%s0] sm:$0xff]
  %v24 = vld [vmem:[%s0 + $0x8] sm:$0xff]
  %v25 = vld [vmem:[%s0 + $0x10] sm:$0xff]
  %v26 = vld [vmem:[%s0 + $0x18] sm:$0xff]
  %v27 = vld [vmem:[%s0 + $0x20] sm:$0xff]
  %v28 = vld [vmem:[%s3] sm:$0xff]
  %v29 = vld [vmem:[%s3 + $0x8] sm:$0xff]
  %v30 = vld [vmem:[%s3 + $0x10] sm:$0xff]
  %v31 = vld [vmem:[%s3 + $0x18] sm:$0xff]
  %v32 = vld [vmem:[%s3 + $0x20] sm:$0xff]
  %v33 = vld [vmem:[%s3 + $0x28] sm:$0xff]
  %v34 = vld [vmem:[%s3 + $0x30] sm:$0xff]
  %v35 = vld [vmem:[%s3 + $0x38] sm:$0xff]
  %v36 = vld [vmem:[%s4] sm:$0x1]
  %v38 = vlaneseq
  %v39 = vshrl.u32 %v38, 7
  %v40 = vsub.s32 0, %v39
  %v41 = vrot.slane %v36, %v40
  %vm43 = vcmask 523264
  %v45 = vsel %vm43, %v23, 0
  %v48 = vsel %vm43, %v24, 0
  %v51 = vsel %vm43, %v25, 0
  %v54 = vsel %vm43, %v26, 0
  %v57 = vsel %vm43, %v27, 0
  %59 = vmatprep.subr.mxu0 0.0
  %60 = vmatpush1.msra.mxu0 %v28
  %61 = vmatprep.subr.mxu0 0.0
  %62 = vmatpush1.msra.mxu0 %v29
  %63 = vmatprep.subr.mxu0 0.0
  %64 = vmatpush1.msra.mxu0 %v30
  %65 = vmatprep.subr.mxu0 0.0
  %66 = vmatpush1.msra.mxu0 %v31
  %67 = vmatprep.subr.mxu0 0.0
  %68 = vmatpush1.msra.mxu0 %v32
  %69 = vmatprep.subr.mxu0 0.0
  %70 = vmatpush1.msra.mxu0 %v33
  %71 = vmatprep.subr.mxu0 0.0
  %72 = vmatpush1.msra.mxu0 %v34
  %73 = vmatprep.subr.mxu0 0.0
  %74 = vmatpush1.msra.mxu0 %v35
  %75 = vmatprep.subr.mxu0 0.0
  %76 = vmatpush1.msra.mxu0 0.0
  %77 = vmatprep.subr.mxu0 0.0
  %78 = vmatpush1.msra.mxu0 0.0
  %79 = vmatprep.subr.mxu0 0.0
  %80 = vmatpush1.msra.mxu0 0.0
  %81 = vmatprep.subr.mxu0 0.0
  %82 = vmatpush1.msra.mxu0 0.0
  %83 = vmatprep.subr.mxu0 0.0
  %84 = vmatpush1.msra.mxu0 0.0
  %85 = vmatprep.subr.mxu0 0.0
  %86 = vmatpush1.msra.mxu0 0.0
  %87 = vmatprep.subr.mxu0 0.0
  %88 = vmatpush1.msra.mxu0 0.0
  %89 = vmatprep.subr.mxu0 0.0
  %90 = vmatpush1.msra.mxu0 0.0
  %91 = vmatprep.subr.mxu0 0.0
  %92 = vmatpush1.msra.mxu0 0.0
  %93 = vmatprep.subr.mxu0 0.0
  %94 = vmatpush1.msra.mxu0 0.0
  %95 = vmatprep.subr.mxu0 0.0
  %96 = vmatpush1.msra.mxu0 0.0
  %97 = vmatprep.subr.mxu0 0.0
  %98 = vmatpush1.msra.mxu0 0.0
  %99 = vmatprep.subr.mxu0 0.0
  %100 = vmatpush1.msra.mxu0 0.0
  %101 = vmatprep.subr.mxu0 0.0
  %102 = vmatpush1.msra.mxu0 0.0
  %103 = vmatprep.subr.mxu0 0.0
  %104 = vmatpush1.msra.mxu0 0.0
  %105 = vmatprep.subr.mxu0 0.0
  %106 = vmatpush1.msra.mxu0 0.0
  %107 = vmatprep.subr.mxu0 0.0
  %108 = vmatpush1.msra.mxu0 0.0
  %109 = vmatprep.subr.mxu0 0.0
  %110 = vmatpush1.msra.mxu0 0.0
  %111 = vmatprep.subr.mxu0 0.0
  %112 = vmatpush1.msra.mxu0 0.0
  %113 = vmatprep.subr.mxu0 0.0
  %114 = vmatpush1.msra.mxu0 0.0
  %115 = vmatprep.subr.mxu0 0.0
  %116 = vmatpush1.msra.mxu0 0.0
  %117 = vmatprep.subr.mxu0 0.0
  %118 = vmatpush1.msra.mxu0 0.0
  %119 = vmatprep.subr.mxu0 0.0
  %120 = vmatpush1.msra.mxu0 0.0
  %121 = vmatprep.subr.mxu0 0.0
  %122 = vmatpush1.msra.mxu0 0.0
  %123 = vmatprep.mubr.f32.mxu0 0.0
  %124 = vmatmul.mubr.f32.gmra.mrb[0].mxu0 %v45
  %v125 = vpop.f32.mrb[0].mxu0
  %v126 = vadd.f32 %v41, %v125
  %v127 = vpop.f32.mrb[0].mxu0
  %128 = vmatprep.mubr.f32.mxu0 0.0
  %129 = vmatmul.mubr.f32.gmra.mrb[0].mxu0 %v48
  %v130 = vpop.f32.mrb[0].mxu0
  %v131 = vadd.f32 %v41, %v130
  %v132 = vpop.f32.mrb[0].mxu0
  %133 = vmatprep.mubr.f32.mxu0 0.0
  %134 = vmatmul.mubr.f32.gmra.mrb[0].mxu0 %v51
  %v135 = vpop.f32.mrb[0].mxu0
  %v136 = vadd.f32 %v41, %v135
  %v137 = vpop.f32.mrb[0].mxu0
  %138 = vmatprep.mubr.f32.mxu0 0.0
  %139 = vmatmul.mubr.f32.gmra.mrb[0].mxu0 %v54
  %v140 = vpop.f32.mrb[0].mxu0
  %v141 = vadd.f32 %v41, %v140
  %v142 = vpop.f32.mrb[0].mxu0
  %143 = vmatprep.mubr.f32.mxu0 0.0
  %144 = vmatmul.mubr.f32.gmra.mrb[0].mxu0 %v57
  %v145 = vpop.f32.mrb[0].mxu0
  %v146 = vadd.f32 %v41, %v145
  %v147 = vpop.f32.mrb[0].mxu0
  %148 = vdwg.mxu0
  %vm149 = vcmp.ge.f32.partialorder %v126, 0.0
  %vm150 = vcmp.ge.f32.partialorder %v131, 0.0
  %vm151 = vcmp.ge.f32.partialorder %v136, 0.0
  %vm152 = vcmp.ge.f32.partialorder %v141, 0.0
  %vm153 = vcmp.ge.f32.partialorder %v146, 0.0
  %v154 = vmul.f32 %v126, 0.01
  %v155 = vmul.f32 %v131, 0.01
  %v156 = vmul.f32 %v136, 0.01
  %v157 = vmul.f32 %v141, 0.01
  %v158 = vmul.f32 %v146, 0.01
  %v159 = vsel %vm149, %v126, %v154
  %v160 = vsel %vm150, %v131, %v155
  %v161 = vsel %vm151, %v136, %v156
  %v162 = vsel %vm152, %v141, %v157
  %v163 = vsel %vm153, %v146, %v158
  %v169 = vcombine.high %v159, %v159
  %v171 = vunpack.c.l.s4 1966171168
  %v172 = vunpack.c.0.s8 %v171
  %v173 = vlaneseq
  %v174 = vshrl.u32 %v173, 7
  %v175 = vsub.s32 %v172, %v174
  %v176 = vrot.slane %v159, %v175
  %v178 = vunpack.c.l.s4 1966171168
  %v179 = vunpack.c.0.s8 %v178
  %v180 = vlaneseq
  %v181 = vshrl.u32 %v180, 7
  %v182 = vsub.s32 %v179, %v181
  %v183 = vrot.slane %v169, %v182
  %v184 = vcombine.high %v176, %v176
  %v185 = vcombine.high %v183, %v183
  %v187 = vunpack.c.l.s4 1966171168
  %v188 = vunpack.c.0.s8 %v187
  %v189 = vlaneseq
  %v190 = vshrl.u32 %v189, 7
  %v191 = vsub.s32 %v188, %v190
  %v192 = vrot.slane %v176, %v191
  %v194 = vunpack.c.l.s4 1966171168
  %v195 = vunpack.c.0.s8 %v194
  %v196 = vlaneseq
  %v197 = vshrl.u32 %v196, 7
  %v198 = vsub.s32 %v195, %v197
  %v199 = vrot.slane %v183, %v198
  %v201 = vunpack.c.l.s4 1966171168
  %v202 = vunpack.c.0.s8 %v201
  %v203 = vlaneseq
  %v204 = vshrl.u32 %v203, 7
  %v205 = vsub.s32 %v202, %v204
  %v206 = vrot.slane %v184, %v205
  %v208 = vunpack.c.l.s4 1966171168
  %v209 = vunpack.c.0.s8 %v208
  %v210 = vlaneseq
  %v211 = vshrl.u32 %v210, 7
  %v212 = vsub.s32 %v209, %v211
  %v213 = vrot.slane %v185, %v212
  %v214 = vcombine.high %v192, %v192
  %v215 = vcombine.high %v199, %v199
  %v216 = vcombine.high %v206, %v206
  %v217 = vcombine.high %v213, %v213
  %v218 = vcombine.high %v160, %v160
  %v220 = vunpack.c.l.s4 1966171168
  %v221 = vunpack.c.0.s8 %v220
  %v222 = vlaneseq
  %v223 = vshrl.u32 %v222, 7
  %v224 = vsub.s32 %v221, %v223
  %v225 = vrot.slane %v160, %v224
  %v227 = vunpack.c.l.s4 1966171168
  %v228 = vunpack.c.0.s8 %v227
  %v229 = vlaneseq
  %v230 = vshrl.u32 %v229, 7
  %v231 = vsub.s32 %v228, %v230
  %v232 = vrot.slane %v218, %v231
  %v233 = vcombine.high %v225, %v225
  %v234 = vcombine.high %v232, %v232
  %v236 = vunpack.c.l.s4 1966171168
  %v237 = vunpack.c.0.s8 %v236
  %v238 = vlaneseq
  %v239 = vshrl.u32 %v238, 7
  %v240 = vsub.s32 %v237, %v239
  %v241 = vrot.slane %v225, %v240
  %v243 = vunpack.c.l.s4 1966171168
  %v244 = vunpack.c.0.s8 %v243
  %v245 = vlaneseq
  %v246 = vshrl.u32 %v245, 7
  %v247 = vsub.s32 %v244, %v246
  %v248 = vrot.slane %v232, %v247
  %v250 = vunpack.c.l.s4 1966171168
  %v251 = vunpack.c.0.s8 %v250
  %v252 = vlaneseq
  %v253 = vshrl.u32 %v252, 7
  %v254 = vsub.s32 %v251, %v253
  %v255 = vrot.slane %v233, %v254
  %v257 = vunpack.c.l.s4 1966171168
  %v258 = vunpack.c.0.s8 %v257
  %v259 = vlaneseq
  %v260 = vshrl.u32 %v259, 7
  %v261 = vsub.s32 %v258, %v260
  %v262 = vrot.slane %v234, %v261
  %v263 = vcombine.high %v241, %v241
  %v264 = vcombine.high %v248, %v248
  %v265 = vcombine.high %v255, %v255
  %v266 = vcombine.high %v262, %v262
  %v267 = vcombine.high %v161, %v161
  %v269 = vunpack.c.l.s4 1966171168
  %v270 = vunpack.c.0.s8 %v269
  %v271 = vlaneseq
  %v272 = vshrl.u32 %v271, 7
  %v273 = vsub.s32 %v270, %v272
  %v274 = vrot.slane %v161, %v273
  %v276 = vunpack.c.l.s4 1966171168
  %v277 = vunpack.c.0.s8 %v276
  %v278 = vlaneseq
  %v279 = vshrl.u32 %v278, 7
  %v280 = vsub.s32 %v277, %v279
  %v281 = vrot.slane %v267, %v280
  %v282 = vcombine.high %v274, %v274
  %v283 = vcombine.high %v281, %v281
  %v285 = vunpack.c.l.s4 1966171168
  %v286 = vunpack.c.0.s8 %v285
  %v287 = vlaneseq
  %v288 = vshrl.u32 %v287, 7
  %v289 = vsub.s32 %v286, %v288
  %v290 = vrot.slane %v274, %v289
  %v292 = vunpack.c.l.s4 1966171168
  %v293 = vunpack.c.0.s8 %v292
  %v294 = vlaneseq
  %v295 = vshrl.u32 %v294, 7
  %v296 = vsub.s32 %v293, %v295
  %v297 = vrot.slane %v281, %v296
  %v299 = vunpack.c.l.s4 1966171168
  %v300 = vunpack.c.0.s8 %v299
  %v301 = vlaneseq
  %v302 = vshrl.u32 %v301, 7
  %v303 = vsub.s32 %v300, %v302
  %v304 = vrot.slane %v282, %v303
  %v306 = vunpack.c.l.s4 1966171168
  %v307 = vunpack.c.0.s8 %v306
  %v308 = vlaneseq
  %v309 = vshrl.u32 %v308, 7
  %v310 = vsub.s32 %v307, %v309
  %v311 = vrot.slane %v283, %v310
  %v312 = vcombine.high %v290, %v290
  %v313 = vcombine.high %v297, %v297
  %v314 = vcombine.high %v304, %v304
  %v315 = vcombine.high %v311, %v311
  %v316 = vcombine.high %v162, %v162
  %v318 = vunpack.c.l.s4 1966171168
  %v319 = vunpack.c.0.s8 %v318
  %v320 = vlaneseq
  %v321 = vshrl.u32 %v320, 7
  %v322 = vsub.s32 %v319, %v321
  %v323 = vrot.slane %v162, %v322
  %v325 = vunpack.c.l.s4 1966171168
  %v326 = vunpack.c.0.s8 %v325
  %v327 = vlaneseq
  %v328 = vshrl.u32 %v327, 7
  %v329 = vsub.s32 %v326, %v328
  %v330 = vrot.slane %v316, %v329
  %v331 = vcombine.high %v323, %v323
  %v332 = vcombine.high %v330, %v330
  %v334 = vunpack.c.l.s4 1966171168
  %v335 = vunpack.c.0.s8 %v334
  %v336 = vlaneseq
  %v337 = vshrl.u32 %v336, 7
  %v338 = vsub.s32 %v335, %v337
  %v339 = vrot.slane %v323, %v338
  %v341 = vunpack.c.l.s4 1966171168
  %v342 = vunpack.c.0.s8 %v341
  %v343 = vlaneseq
  %v344 = vshrl.u32 %v343, 7
  %v345 = vsub.s32 %v342, %v344
  %v346 = vrot.slane %v330, %v345
  %v348 = vunpack.c.l.s4 1966171168
  %v349 = vunpack.c.0.s8 %v348
  %v350 = vlaneseq
  %v351 = vshrl.u32 %v350, 7
  %v352 = vsub.s32 %v349, %v351
  %v353 = vrot.slane %v331, %v352
  %v355 = vunpack.c.l.s4 1966171168
  %v356 = vunpack.c.0.s8 %v355
  %v357 = vlaneseq
  %v358 = vshrl.u32 %v357, 7
  %v359 = vsub.s32 %v356, %v358
  %v360 = vrot.slane %v332, %v359
  %v361 = vcombine.high %v339, %v339
  %v362 = vcombine.high %v346, %v346
  %v363 = vcombine.high %v353, %v353
  %v364 = vcombine.high %v360, %v360
  %v365 = vcombine.high %v163, %v163
  %v367 = vunpack.c.l.s4 1966171168
  %v368 = vunpack.c.0.s8 %v367
  %v369 = vlaneseq
  %v370 = vshrl.u32 %v369, 7
  %v371 = vsub.s32 %v368, %v370
  %v372 = vrot.slane %v163, %v371
  %v374 = vunpack.c.l.s4 1966171168
  %v375 = vunpack.c.0.s8 %v374
  %v376 = vlaneseq
  %v377 = vshrl.u32 %v376, 7
  %v378 = vsub.s32 %v375, %v377
  %v379 = vrot.slane %v365, %v378
  %v380 = vcombine.high %v372, %v372
  %v381 = vcombine.high %v379, %v379
  %v383 = vunpack.c.l.s4 1966171168
  %v384 = vunpack.c.0.s8 %v383
  %v385 = vlaneseq
  %v386 = vshrl.u32 %v385, 7
  %v387 = vsub.s32 %v384, %v386
  %v388 = vrot.slane %v372, %v387
  %v390 = vunpack.c.l.s4 1966171168
  %v391 = vunpack.c.0.s8 %v390
  %v392 = vlaneseq
  %v393 = vshrl.u32 %v392, 7
  %v394 = vsub.s32 %v391, %v393
  %v395 = vrot.slane %v379, %v394
  %v397 = vunpack.c.l.s4 1966171168
  %v398 = vunpack.c.0.s8 %v397
  %v399 = vlaneseq
  %v400 = vshrl.u32 %v399, 7
  %v401 = vsub.s32 %v398, %v400
  %v402 = vrot.slane %v380, %v401
  %v404 = vunpack.c.l.s4 1966171168
  %v405 = vunpack.c.0.s8 %v404
  %v406 = vlaneseq
  %v407 = vshrl.u32 %v406, 7
  %v408 = vsub.s32 %v405, %v407
  %v409 = vrot.slane %v381, %v408
  %v410 = vcombine.high %v388, %v388
  %v411 = vcombine.high %v395, %v395
  %v412 = vcombine.high %v402, %v402
  %v413 = vcombine.high %v409, %v409
  %v454 = vld [vmem:[%s5] sm:$0x1]
  %v456 = vlaneseq
  %v457 = vshrl.u32 %v456, 7
  %v458 = vsub.s32 0, %v457
  %v459 = vrot.slane %v454, %v458
  %v460 = vcombine.high %v459, %v459
  %v462 = vunpack.c.l.s4 1966171168
  %v463 = vunpack.c.0.s8 %v462
  %v464 = vlaneseq
  %v465 = vshrl.u32 %v464, 7
  %v466 = vsub.s32 %v463, %v465
  %v467 = vrot.slane %v459, %v466
  %v469 = vunpack.c.l.s4 1966171168
  %v470 = vunpack.c.0.s8 %v469
  %v471 = vlaneseq
  %v472 = vshrl.u32 %v471, 7
  %v473 = vsub.s32 %v470, %v472
  %v474 = vrot.slane %v460, %v473
  %v475 = vcombine.high %v467, %v467
  %v477 = vunpack.c.l.s4 1966171168
  %v478 = vunpack.c.0.s8 %v477
  %v479 = vlaneseq
  %v480 = vshrl.u32 %v479, 7
  %v481 = vsub.s32 %v478, %v480
  %v482 = vrot.slane %v467, %v481
  %v484 = vunpack.c.l.s4 1966171168
  %v485 = vunpack.c.0.s8 %v484
  %v486 = vlaneseq
  %v487 = vshrl.u32 %v486, 7
  %v488 = vsub.s32 %v485, %v487
  %v489 = vrot.slane %v474, %v488
  %v491 = vunpack.c.l.s4 1966171168
  %v492 = vunpack.c.0.s8 %v491
  %v493 = vlaneseq
  %v494 = vshrl.u32 %v493, 7
  %v495 = vsub.s32 %v492, %v494
  %v496 = vrot.slane %v475, %v495
  %v497 = vcombine.high %v482, %v482
  %v498 = vcombine.high %v496, %v496
  %v504 = vmul.f32 %v192, %v482
  %v505 = vmul.f32 %v206, %v496
  %v506 = vmul.f32 %v214, %v497
  %v507 = vmul.f32 %v216, %v498
  %v508 = vmul.f32 %v199, %v489
  %v509 = vmul.f32 %v213, %v482
  %v510 = vmul.f32 %v215, %v496
  %v511 = vmul.f32 %v217, %v497
  %v512 = vmul.f32 %v241, %v498
  %v513 = vmul.f32 %v255, %v489
  %v514 = vmul.f32 %v263, %v482
  %v515 = vmul.f32 %v265, %v496
  %v516 = vmul.f32 %v248, %v497
  %v517 = vmul.f32 %v262, %v498
  %v518 = vmul.f32 %v264, %v489
  %v519 = vmul.f32 %v266, %v482
  %v520 = vmul.f32 %v290, %v496
  %v521 = vmul.f32 %v304, %v497
  %v522 = vmul.f32 %v312, %v498
  %v523 = vmul.f32 %v314, %v489
  %v524 = vmul.f32 %v297, %v482
  %v525 = vmul.f32 %v311, %v496
  %v526 = vmul.f32 %v313, %v497
  %v527 = vmul.f32 %v315, %v498
  %v528 = vmul.f32 %v339, %v489
  %v529 = vmul.f32 %v353, %v482
  %v530 = vmul.f32 %v361, %v496
  %v531 = vmul.f32 %v363, %v497
  %v532 = vmul.f32 %v346, %v498
  %v533 = vmul.f32 %v360, %v489
  %v534 = vmul.f32 %v362, %v482
  %v535 = vmul.f32 %v364, %v496
  %v536 = vmul.f32 %v388, %v497
  %v537 = vmul.f32 %v402, %v498
  %v538 = vmul.f32 %v410, %v489
  %v539 = vmul.f32 %v412, %v482
  %v540 = vmul.f32 %v395, %v496
  %v541 = vmul.f32 %v409, %v497
  %v542 = vmul.f32 %v411, %v498
  %v543 = vmul.f32 %v413, %v489
  %v584 = vcombine.low %v504, %v505
  %v585 = vcombine.low %v506, %v507
  %v587 = vunpack.c.l.s4 1966171168
  %v588 = vunpack.c.0.s8 %v587
  %v589 = vlaneseq
  %v590 = vshrl.u32 %v589, 7
  %v591 = vsub.s32 %v588, %v590
  %v592 = vrot.slane %v584, %v591
  %v594 = vunpack.c.l.s4 1966171168
  %v595 = vunpack.c.0.s8 %v594
  %v596 = vlaneseq
  %v597 = vshrl.u32 %v596, 7
  %v598 = vsub.s32 %v595, %v597
  %v599 = vrot.slane %v585, %v598
  %v601 = vunpack.c.l.s4 1966171168
  %v602 = vunpack.c.0.s8 %v601
  %v603 = vlaneseq
  %v604 = vshrl.u32 %v603, 7
  %v605 = vsub.s32 %v602, %v604
  %v606 = vrot.slane %v508, %v605
  %v607 = vcombine.low %v592, %v599
  %v609 = vunpack.c.l.s4 1966171168
  %v610 = vunpack.c.0.s8 %v609
  %v611 = vlaneseq
  %v612 = vshrl.u32 %v611, 7
  %v613 = vsub.s32 %v610, %v612
  %v614 = vrot.slane %v607, %v613
  %v616 = vunpack.c.l.s4 1966171168
  %v617 = vunpack.c.0.s8 %v616
  %v618 = vlaneseq
  %v619 = vshrl.u32 %v618, 7
  %v620 = vsub.s32 %v617, %v619
  %v621 = vrot.slane %v606, %v620
  %v622 = vcombine.low %v614, %v621
  %v623 = vcombine.low %v509, %v510
  %v624 = vcombine.low %v511, %v512
  %v626 = vunpack.c.l.s4 1966171168
  %v627 = vunpack.c.0.s8 %v626
  %v628 = vlaneseq
  %v629 = vshrl.u32 %v628, 7
  %v630 = vsub.s32 %v627, %v629
  %v631 = vrot.slane %v623, %v630
  %v633 = vunpack.c.l.s4 1966171168
  %v634 = vunpack.c.0.s8 %v633
  %v635 = vlaneseq
  %v636 = vshrl.u32 %v635, 7
  %v637 = vsub.s32 %v634, %v636
  %v638 = vrot.slane %v624, %v637
  %v640 = vunpack.c.l.s4 1966171168
  %v641 = vunpack.c.0.s8 %v640
  %v642 = vlaneseq
  %v643 = vshrl.u32 %v642, 7
  %v644 = vsub.s32 %v641, %v643
  %v645 = vrot.slane %v513, %v644
  %v646 = vcombine.low %v631, %v638
  %v648 = vunpack.c.l.s4 1966171168
  %v649 = vunpack.c.0.s8 %v648
  %v650 = vlaneseq
  %v651 = vshrl.u32 %v650, 7
  %v652 = vsub.s32 %v649, %v651
  %v653 = vrot.slane %v646, %v652
  %v655 = vunpack.c.l.s4 1966171168
  %v656 = vunpack.c.0.s8 %v655
  %v657 = vlaneseq
  %v658 = vshrl.u32 %v657, 7
  %v659 = vsub.s32 %v656, %v658
  %v660 = vrot.slane %v645, %v659
  %v661 = vcombine.low %v653, %v660
  %v662 = vcombine.low %v514, %v515
  %v663 = vcombine.low %v516, %v517
  %v665 = vunpack.c.l.s4 1966171168
  %v666 = vunpack.c.0.s8 %v665
  %v667 = vlaneseq
  %v668 = vshrl.u32 %v667, 7
  %v669 = vsub.s32 %v666, %v668
  %v670 = vrot.slane %v662, %v669
  %v672 = vunpack.c.l.s4 1966171168
  %v673 = vunpack.c.0.s8 %v672
  %v674 = vlaneseq
  %v675 = vshrl.u32 %v674, 7
  %v676 = vsub.s32 %v673, %v675
  %v677 = vrot.slane %v663, %v676
  %v679 = vunpack.c.l.s4 1966171168
  %v680 = vunpack.c.0.s8 %v679
  %v681 = vlaneseq
  %v682 = vshrl.u32 %v681, 7
  %v683 = vsub.s32 %v680, %v682
  %v684 = vrot.slane %v518, %v683
  %v685 = vcombine.low %v670, %v677
  %v687 = vunpack.c.l.s4 1966171168
  %v688 = vunpack.c.0.s8 %v687
  %v689 = vlaneseq
  %v690 = vshrl.u32 %v689, 7
  %v691 = vsub.s32 %v688, %v690
  %v692 = vrot.slane %v685, %v691
  %v694 = vunpack.c.l.s4 1966171168
  %v695 = vunpack.c.0.s8 %v694
  %v696 = vlaneseq
  %v697 = vshrl.u32 %v696, 7
  %v698 = vsub.s32 %v695, %v697
  %v699 = vrot.slane %v684, %v698
  %v700 = vcombine.low %v692, %v699
  %v701 = vcombine.low %v519, %v520
  %v702 = vcombine.low %v521, %v522
  %v704 = vunpack.c.l.s4 1966171168
  %v705 = vunpack.c.0.s8 %v704
  %v706 = vlaneseq
  %v707 = vshrl.u32 %v706, 7
  %v708 = vsub.s32 %v705, %v707
  %v709 = vrot.slane %v701, %v708
  %v711 = vunpack.c.l.s4 1966171168
  %v712 = vunpack.c.0.s8 %v711
  %v713 = vlaneseq
  %v714 = vshrl.u32 %v713, 7
  %v715 = vsub.s32 %v712, %v714
  %v716 = vrot.slane %v702, %v715
  %v718 = vunpack.c.l.s4 1966171168
  %v719 = vunpack.c.0.s8 %v718
  %v720 = vlaneseq
  %v721 = vshrl.u32 %v720, 7
  %v722 = vsub.s32 %v719, %v721
  %v723 = vrot.slane %v523, %v722
  %v724 = vcombine.low %v709, %v716
  %v726 = vunpack.c.l.s4 1966171168
  %v727 = vunpack.c.0.s8 %v726
  %v728 = vlaneseq
  %v729 = vshrl.u32 %v728, 7
  %v730 = vsub.s32 %v727, %v729
  %v731 = vrot.slane %v724, %v730
  %v733 = vunpack.c.l.s4 1966171168
  %v734 = vunpack.c.0.s8 %v733
  %v735 = vlaneseq
  %v736 = vshrl.u32 %v735, 7
  %v737 = vsub.s32 %v734, %v736
  %v738 = vrot.slane %v723, %v737
  %v739 = vcombine.low %v731, %v738
  %v740 = vcombine.low %v524, %v525
  %v741 = vcombine.low %v526, %v527
  %v743 = vunpack.c.l.s4 1966171168
  %v744 = vunpack.c.0.s8 %v743
  %v745 = vlaneseq
  %v746 = vshrl.u32 %v745, 7
  %v747 = vsub.s32 %v744, %v746
  %v748 = vrot.slane %v740, %v747
  %v750 = vunpack.c.l.s4 1966171168
  %v751 = vunpack.c.0.s8 %v750
  %v752 = vlaneseq
  %v753 = vshrl.u32 %v752, 7
  %v754 = vsub.s32 %v751, %v753
  %v755 = vrot.slane %v741, %v754
  %v757 = vunpack.c.l.s4 1966171168
  %v758 = vunpack.c.0.s8 %v757
  %v759 = vlaneseq
  %v760 = vshrl.u32 %v759, 7
  %v761 = vsub.s32 %v758, %v760
  %v762 = vrot.slane %v528, %v761
  %v763 = vcombine.low %v748, %v755
  %v765 = vunpack.c.l.s4 1966171168
  %v766 = vunpack.c.0.s8 %v765
  %v767 = vlaneseq
  %v768 = vshrl.u32 %v767, 7
  %v769 = vsub.s32 %v766, %v768
  %v770 = vrot.slane %v763, %v769
  %v772 = vunpack.c.l.s4 1966171168
  %v773 = vunpack.c.0.s8 %v772
  %v774 = vlaneseq
  %v775 = vshrl.u32 %v774, 7
  %v776 = vsub.s32 %v773, %v775
  %v777 = vrot.slane %v762, %v776
  %v778 = vcombine.low %v770, %v777
  %v779 = vcombine.low %v529, %v530
  %v780 = vcombine.low %v531, %v532
  %v782 = vunpack.c.l.s4 1966171168
  %v783 = vunpack.c.0.s8 %v782
  %v784 = vlaneseq
  %v785 = vshrl.u32 %v784, 7
  %v786 = vsub.s32 %v783, %v785
  %v787 = vrot.slane %v779, %v786
  %v789 = vunpack.c.l.s4 1966171168
  %v790 = vunpack.c.0.s8 %v789
  %v791 = vlaneseq
  %v792 = vshrl.u32 %v791, 7
  %v793 = vsub.s32 %v790, %v792
  %v794 = vrot.slane %v780, %v793
  %v796 = vunpack.c.l.s4 1966171168
  %v797 = vunpack.c.0.s8 %v796
  %v798 = vlaneseq
  %v799 = vshrl.u32 %v798, 7
  %v800 = vsub.s32 %v797, %v799
  %v801 = vrot.slane %v533, %v800
  %v802 = vcombine.low %v787, %v794
  %v804 = vunpack.c.l.s4 1966171168
  %v805 = vunpack.c.0.s8 %v804
  %v806 = vlaneseq
  %v807 = vshrl.u32 %v806, 7
  %v808 = vsub.s32 %v805, %v807
  %v809 = vrot.slane %v802, %v808
  %v811 = vunpack.c.l.s4 1966171168
  %v812 = vunpack.c.0.s8 %v811
  %v813 = vlaneseq
  %v814 = vshrl.u32 %v813, 7
  %v815 = vsub.s32 %v812, %v814
  %v816 = vrot.slane %v801, %v815
  %v817 = vcombine.low %v809, %v816
  %v818 = vcombine.low %v534, %v535
  %v819 = vcombine.low %v536, %v537
  %v821 = vunpack.c.l.s4 1966171168
  %v822 = vunpack.c.0.s8 %v821
  %v823 = vlaneseq
  %v824 = vshrl.u32 %v823, 7
  %v825 = vsub.s32 %v822, %v824
  %v826 = vrot.slane %v818, %v825
  %v828 = vunpack.c.l.s4 1966171168
  %v829 = vunpack.c.0.s8 %v828
  %v830 = vlaneseq
  %v831 = vshrl.u32 %v830, 7
  %v832 = vsub.s32 %v829, %v831
  %v833 = vrot.slane %v819, %v832
  %v835 = vunpack.c.l.s4 1966171168
  %v836 = vunpack.c.0.s8 %v835
  %v837 = vlaneseq
  %v838 = vshrl.u32 %v837, 7
  %v839 = vsub.s32 %v836, %v838
  %v840 = vrot.slane %v538, %v839
  %v841 = vcombine.low %v826, %v833
  %v843 = vunpack.c.l.s4 1966171168
  %v844 = vunpack.c.0.s8 %v843
  %v845 = vlaneseq
  %v846 = vshrl.u32 %v845, 7
  %v847 = vsub.s32 %v844, %v846
  %v848 = vrot.slane %v841, %v847
  %v850 = vunpack.c.l.s4 1966171168
  %v851 = vunpack.c.0.s8 %v850
  %v852 = vlaneseq
  %v853 = vshrl.u32 %v852, 7
  %v854 = vsub.s32 %v851, %v853
  %v855 = vrot.slane %v840, %v854
  %v856 = vcombine.low %v848, %v855
  %v857 = vcombine.low %v539, %v540
  %v858 = vcombine.low %v541, %v542
  %v860 = vunpack.c.l.s4 1966171168
  %v861 = vunpack.c.0.s8 %v860
  %v862 = vlaneseq
  %v863 = vshrl.u32 %v862, 7
  %v864 = vsub.s32 %v861, %v863
  %v865 = vrot.slane %v857, %v864
  %v867 = vunpack.c.l.s4 1966171168
  %v868 = vunpack.c.0.s8 %v867
  %v869 = vlaneseq
  %v870 = vshrl.u32 %v869, 7
  %v871 = vsub.s32 %v868, %v870
  %v872 = vrot.slane %v858, %v871
  %v874 = vunpack.c.l.s4 1966171168
  %v875 = vunpack.c.0.s8 %v874
  %v876 = vlaneseq
  %v877 = vshrl.u32 %v876, 7
  %v878 = vsub.s32 %v875, %v877
  %v879 = vrot.slane %v543, %v878
  %v880 = vcombine.low %v865, %v872
  %v882 = vunpack.c.l.s4 1966171168
  %v883 = vunpack.c.0.s8 %v882
  %v884 = vlaneseq
  %v885 = vshrl.u32 %v884, 7
  %v886 = vsub.s32 %v883, %v885
  %v887 = vrot.slane %v880, %v886
  %v889 = vunpack.c.l.s4 1966171168
  %v890 = vunpack.c.0.s8 %v889
  %v891 = vlaneseq
  %v892 = vshrl.u32 %v891, 7
  %v893 = vsub.s32 %v890, %v892
  %v894 = vrot.slane %v879, %v893
  %v895 = vcombine.low %v887, %v894
  %vm904 = vcmask 126976
  %v905 = vsel %vm904, %v622, 0.0
  %906 = vadd.xlane.f32.xlu0 %v905
  %v907 = vpop.xlane.xlu0 %906
  %v908 = vsel %vm904, %v661, 0.0
  %909 = vadd.xlane.f32.xlu0 %v908
  %v910 = vpop.xlane.xlu0 %909
  %v911 = vsel %vm904, %v700, 0.0
  %912 = vadd.xlane.f32.xlu0 %v911
  %v913 = vpop.xlane.xlu0 %912
  %v914 = vsel %vm904, %v739, 0.0
  %915 = vadd.xlane.f32.xlu0 %v914
  %v916 = vpop.xlane.xlu0 %915
  %v917 = vsel %vm904, %v778, 0.0
  %918 = vadd.xlane.f32.xlu0 %v917
  %v919 = vpop.xlane.xlu0 %918
  %v920 = vsel %vm904, %v817, 0.0
  %921 = vadd.xlane.f32.xlu0 %v920
  %v922 = vpop.xlane.xlu0 %921
  %v923 = vsel %vm904, %v856, 0.0
  %924 = vadd.xlane.f32.xlu0 %v923
  %v925 = vpop.xlane.xlu0 %924
  %v926 = vsel %vm904, %v895, 0.0
  %927 = vadd.xlane.f32.xlu0 %v926
  %v928 = vpop.xlane.xlu0 %927
  %v929 = vld [vmem:[%s1] sm:$0xff]
  %v931 = vlaneseq
  %v932 = vshrl.u32 %v931, 7
  %v933 = vsub.s32 0, %v932
  %v934 = vrot.slane %v929, %v933
  %936 = vbcast.lane.b32.xlu0 %v934, 256
  %v937 = vpop.permute.xlu0 %936
  %v938 = vlaneseq
  %v939 = vshrl.u32 %v938, 7
  %v940 = vsub.s32 1, %v939
  %v941 = vrot.slane %v929, %v940
  %943 = vbcast.lane.b32.xlu0 %v941, 256
  %v944 = vpop.permute.xlu0 %943
  %v945 = vlaneseq
  %v946 = vshrl.u32 %v945, 7
  %v947 = vsub.s32 2, %v946
  %v948 = vrot.slane %v929, %v947
  %950 = vbcast.lane.b32.xlu0 %v948, 256
  %v951 = vpop.permute.xlu0 %950
  %v952 = vlaneseq
  %v953 = vshrl.u32 %v952, 7
  %v954 = vsub.s32 3, %v953
  %v955 = vrot.slane %v929, %v954
  %957 = vbcast.lane.b32.xlu0 %v955, 256
  %v958 = vpop.permute.xlu0 %957
  %v959 = vlaneseq
  %v960 = vshrl.u32 %v959, 7
  %v961 = vsub.s32 4, %v960
  %v962 = vrot.slane %v929, %v961
  %964 = vbcast.lane.b32.xlu0 %v962, 256
  %v965 = vpop.permute.xlu0 %964
  %v966 = vlaneseq
  %v967 = vshrl.u32 %v966, 7
  %v968 = vsub.s32 5, %v967
  %v969 = vrot.slane %v929, %v968
  %971 = vbcast.lane.b32.xlu0 %v969, 256
  %v972 = vpop.permute.xlu0 %971
  %v973 = vlaneseq
  %v974 = vshrl.u32 %v973, 7
  %v975 = vsub.s32 6, %v974
  %v976 = vrot.slane %v929, %v975
  %978 = vbcast.lane.b32.xlu0 %v976, 256
  %v979 = vpop.permute.xlu0 %978
  %v980 = vlaneseq
  %v981 = vshrl.u32 %v980, 7
  %v982 = vsub.s32 7, %v981
  %v983 = vrot.slane %v929, %v982
  %985 = vbcast.lane.b32.xlu0 %v983, 256
  %v986 = vpop.permute.xlu0 %985
  %v995 = vadd.f32 %v907, %v937
  %v996 = vadd.f32 %v910, %v944
  %v997 = vadd.f32 %v913, %v951
  %v998 = vadd.f32 %v916, %v958
  %v999 = vadd.f32 %v919, %v965
  %v1000 = vadd.f32 %v922, %v972
  %v1001 = vadd.f32 %v925, %v979
  %v1002 = vadd.f32 %v928, %v986
  %1011 = vset.pattern.permute.xlu0 0
  %1012 = vperm.xlu0 %1011, %v995
  %v1013 = vpop.permute.xlu0 %1012
  %1014 = vset.pattern.permute.xlu0 0
  %1015 = vperm.xlu0 %1014, %v996
  %v1016 = vpop.permute.xlu0 %1015
  %1017 = vset.pattern.permute.xlu0 0
  %1018 = vperm.xlu0 %1017, %v997
  %v1019 = vpop.permute.xlu0 %1018
  %1020 = vset.pattern.permute.xlu0 0
  %1021 = vperm.xlu0 %1020, %v998
  %v1022 = vpop.permute.xlu0 %1021
  %1023 = vset.pattern.permute.xlu0 0
  %1024 = vperm.xlu0 %1023, %v999
  %v1025 = vpop.permute.xlu0 %1024
  %1026 = vset.pattern.permute.xlu0 0
  %1027 = vperm.xlu0 %1026, %v1000
  %v1028 = vpop.permute.xlu0 %1027
  %1029 = vset.pattern.permute.xlu0 0
  %1030 = vperm.xlu0 %1029, %v1001
  %v1031 = vpop.permute.xlu0 %1030
  %1032 = vset.pattern.permute.xlu0 0
  %1033 = vperm.xlu0 %1032, %v1002
  %v1034 = vpop.permute.xlu0 %1033
  %v1035 = vlaneseq
  %v1036 = vand.u32 %v1035, 127
  %v1037 = vlaneseq
  %v1038 = vshrl.u32 %v1037, 7
  %v1039 = vsub.s32 %v1036, %v1038
  %v1040 = vrot.slane %v1013, %v1039
  %v1041 = vlaneseq
  %v1042 = vshrl.u32 %v1041, 7
  %v1043 = vsub.s32 %v1036, %v1042
  %v1044 = vrot.slane %v1016, %v1043
  %v1045 = vlaneseq
  %v1046 = vshrl.u32 %v1045, 7
  %v1047 = vsub.s32 %v1036, %v1046
  %v1048 = vrot.slane %v1019, %v1047
  %v1049 = vlaneseq
  %v1050 = vshrl.u32 %v1049, 7
  %v1051 = vsub.s32 %v1036, %v1050
  %v1052 = vrot.slane %v1022, %v1051
  %v1053 = vlaneseq
  %v1054 = vshrl.u32 %v1053, 7
  %v1055 = vsub.s32 %v1036, %v1054
  %v1056 = vrot.slane %v1025, %v1055
  %v1057 = vlaneseq
  %v1058 = vshrl.u32 %v1057, 7
  %v1059 = vsub.s32 %v1036, %v1058
  %v1060 = vrot.slane %v1028, %v1059
  %v1061 = vlaneseq
  %v1062 = vshrl.u32 %v1061, 7
  %v1063 = vsub.s32 %v1036, %v1062
  %v1064 = vrot.slane %v1031, %v1063
  %v1065 = vlaneseq
  %v1066 = vshrl.u32 %v1065, 7
  %v1067 = vsub.s32 %v1036, %v1066
  %v1068 = vrot.slane %v1034, %v1067
  %vm1069 = vcmask 1041409
  %v1070 = vsel %vm1069, %v1044, %v1040
  %vm1071 = vcmask 1042434
  %v1072 = vsel %vm1071, %v1048, %v1070
  %vm1073 = vcmask 1043459
  %v1074 = vsel %vm1073, %v1052, %v1072
  %vm1075 = vcmask 1044484
  %v1076 = vsel %vm1075, %v1056, %v1074
  %vm1077 = vcmask 1045509
  %v1078 = vsel %vm1077, %v1060, %v1076
  %vm1079 = vcmask 1046534
  %v1080 = vsel %vm1079, %v1064, %v1078
  %vm1081 = vcmask 1047559
  %v1082 = vsel %vm1081, %v1068, %v1080
  %vm1084 = vcmask 39936
  %v1085 = vsel %vm1084, %v1082, -inf
  %1086 = vmax.xlane.f32.xlu0 %v1085
  %v1087 = vpop.xlane.xlu0 %1086
  %v1089 = vlaneseq
  %v1090 = vshrl.u32 %v1089, 7
  %v1091 = vsub.s32 0, %v1090
  %v1092 = vrot.slane %v1087, %v1091
  %v1093 = vlaneseq
  %v1094 = vshrl.u32 %v1093, 7
  %v1095 = vsub.s32 1, %v1094
  %v1096 = vrot.slane %v1087, %v1095
  %v1097 = vlaneseq
  %v1098 = vshrl.u32 %v1097, 7
  %v1099 = vsub.s32 2, %v1098
  %v1100 = vrot.slane %v1087, %v1099
  %v1101 = vlaneseq
  %v1102 = vshrl.u32 %v1101, 7
  %v1103 = vsub.s32 3, %v1102
  %v1104 = vrot.slane %v1087, %v1103
  %v1105 = vlaneseq
  %v1106 = vshrl.u32 %v1105, 7
  %v1107 = vsub.s32 4, %v1106
  %v1108 = vrot.slane %v1087, %v1107
  %v1109 = vlaneseq
  %v1110 = vshrl.u32 %v1109, 7
  %v1111 = vsub.s32 5, %v1110
  %v1112 = vrot.slane %v1087, %v1111
  %v1113 = vlaneseq
  %v1114 = vshrl.u32 %v1113, 7
  %v1115 = vsub.s32 6, %v1114
  %v1116 = vrot.slane %v1087, %v1115
  %v1117 = vlaneseq
  %v1118 = vshrl.u32 %v1117, 7
  %v1119 = vsub.s32 7, %v1118
  %v1120 = vrot.slane %v1087, %v1119
  %v1129 = vsub.f32 %v995, %v1092
  %v1130 = vsub.f32 %v996, %v1096
  %v1131 = vsub.f32 %v997, %v1100
  %v1132 = vsub.f32 %v998, %v1104
  %v1133 = vsub.f32 %v999, %v1108
  %v1134 = vsub.f32 %v1000, %v1112
  %v1135 = vsub.f32 %v1001, %v1116
  %v1136 = vsub.f32 %v1002, %v1120
  %v1137 = vmul.f32 %v1129, 1.442695
  %v1138 = vpow.pop %v1137
  %v1139 = vmul.f32 %v1130, 1.442695
  %v1140 = vpow.pop %v1139
  %v1141 = vmul.f32 %v1131, 1.442695
  %v1142 = vpow.pop %v1141
  %v1143 = vmul.f32 %v1132, 1.442695
  %v1144 = vpow.pop %v1143
  %v1145 = vmul.f32 %v1133, 1.442695
  %v1146 = vpow.pop %v1145
  %v1147 = vmul.f32 %v1134, 1.442695
  %v1148 = vpow.pop %v1147
  %v1149 = vmul.f32 %v1135, 1.442695
  %v1150 = vpow.pop %v1149
  %v1151 = vmul.f32 %v1136, 1.442695
  %v1152 = vpow.pop %v1151
  %1161 = vset.pattern.permute.xlu0 0
  %1162 = vperm.xlu0 %1161, %v1138
  %v1163 = vpop.permute.xlu0 %1162
  %1164 = vset.pattern.permute.xlu0 0
  %1165 = vperm.xlu0 %1164, %v1140
  %v1166 = vpop.permute.xlu0 %1165
  %1167 = vset.pattern.permute.xlu0 0
  %1168 = vperm.xlu0 %1167, %v1142
  %v1169 = vpop.permute.xlu0 %1168
  %1170 = vset.pattern.permute.xlu0 0
  %1171 = vperm.xlu0 %1170, %v1144
  %v1172 = vpop.permute.xlu0 %1171
  %1173 = vset.pattern.permute.xlu0 0
  %1174 = vperm.xlu0 %1173, %v1146
  %v1175 = vpop.permute.xlu0 %1174
  %1176 = vset.pattern.permute.xlu0 0
  %1177 = vperm.xlu0 %1176, %v1148
  %v1178 = vpop.permute.xlu0 %1177
  %1179 = vset.pattern.permute.xlu0 0
  %1180 = vperm.xlu0 %1179, %v1150
  %v1181 = vpop.permute.xlu0 %1180
  %1182 = vset.pattern.permute.xlu0 0
  %1183 = vperm.xlu0 %1182, %v1152
  %v1184 = vpop.permute.xlu0 %1183
  %v1185 = vlaneseq
  %v1186 = vshrl.u32 %v1185, 7
  %v1187 = vsub.s32 %v1036, %v1186
  %v1188 = vrot.slane %v1163, %v1187
  %v1189 = vlaneseq
  %v1190 = vshrl.u32 %v1189, 7
  %v1191 = vsub.s32 %v1036, %v1190
  %v1192 = vrot.slane %v1166, %v1191
  %v1193 = vlaneseq
  %v1194 = vshrl.u32 %v1193, 7
  %v1195 = vsub.s32 %v1036, %v1194
  %v1196 = vrot.slane %v1169, %v1195
  %v1197 = vlaneseq
  %v1198 = vshrl.u32 %v1197, 7
  %v1199 = vsub.s32 %v1036, %v1198
  %v1200 = vrot.slane %v1172, %v1199
  %v1201 = vlaneseq
  %v1202 = vshrl.u32 %v1201, 7
  %v1203 = vsub.s32 %v1036, %v1202
  %v1204 = vrot.slane %v1175, %v1203
  %v1205 = vlaneseq
  %v1206 = vshrl.u32 %v1205, 7
  %v1207 = vsub.s32 %v1036, %v1206
  %v1208 = vrot.slane %v1178, %v1207
  %v1209 = vlaneseq
  %v1210 = vshrl.u32 %v1209, 7
  %v1211 = vsub.s32 %v1036, %v1210
  %v1212 = vrot.slane %v1181, %v1211
  %v1213 = vlaneseq
  %v1214 = vshrl.u32 %v1213, 7
  %v1215 = vsub.s32 %v1036, %v1214
  %v1216 = vrot.slane %v1184, %v1215
  %v1217 = vsel %vm1069, %v1192, %v1188
  %v1218 = vsel %vm1071, %v1196, %v1217
  %v1219 = vsel %vm1073, %v1200, %v1218
  %v1220 = vsel %vm1075, %v1204, %v1219
  %v1221 = vsel %vm1077, %v1208, %v1220
  %v1222 = vsel %vm1079, %v1212, %v1221
  %v1223 = vsel %vm1081, %v1216, %v1222
  %v1225 = vsel %vm1084, %v1223, 0.0
  %1226 = vadd.xlane.f32.xlu0 %v1225
  %v1227 = vpop.xlane.xlu0 %1226
  %v1229 = vlaneseq
  %v1230 = vshrl.u32 %v1229, 7
  %v1231 = vsub.s32 0, %v1230
  %v1232 = vrot.slane %v1227, %v1231
  %v1233 = vlaneseq
  %v1234 = vshrl.u32 %v1233, 7
  %v1235 = vsub.s32 1, %v1234
  %v1236 = vrot.slane %v1227, %v1235
  %v1237 = vlaneseq
  %v1238 = vshrl.u32 %v1237, 7
  %v1239 = vsub.s32 2, %v1238
  %v1240 = vrot.slane %v1227, %v1239
  %v1241 = vlaneseq
  %v1242 = vshrl.u32 %v1241, 7
  %v1243 = vsub.s32 3, %v1242
  %v1244 = vrot.slane %v1227, %v1243
  %v1245 = vlaneseq
  %v1246 = vshrl.u32 %v1245, 7
  %v1247 = vsub.s32 4, %v1246
  %v1248 = vrot.slane %v1227, %v1247
  %v1249 = vlaneseq
  %v1250 = vshrl.u32 %v1249, 7
  %v1251 = vsub.s32 5, %v1250
  %v1252 = vrot.slane %v1227, %v1251
  %v1253 = vlaneseq
  %v1254 = vshrl.u32 %v1253, 7
  %v1255 = vsub.s32 6, %v1254
  %v1256 = vrot.slane %v1227, %v1255
  %v1257 = vlaneseq
  %v1258 = vshrl.u32 %v1257, 7
  %v1259 = vsub.s32 7, %v1258
  %v1260 = vrot.slane %v1227, %v1259
  %v1269 = vrcp.pop %v1232
  %v1270 = vmul.f32 %v1138, %v1269
  %v1271 = vrcp.pop %v1236
  %v1272 = vmul.f32 %v1140, %v1271
  %v1273 = vrcp.pop %v1240
  %v1274 = vmul.f32 %v1142, %v1273
  %v1275 = vrcp.pop %v1244
  %v1276 = vmul.f32 %v1144, %v1275
  %v1277 = vrcp.pop %v1248
  %v1278 = vmul.f32 %v1146, %v1277
  %v1279 = vrcp.pop %v1252
  %v1280 = vmul.f32 %v1148, %v1279
  %v1281 = vrcp.pop %v1256
  %v1282 = vmul.f32 %v1150, %v1281
  %v1283 = vrcp.pop %v1260
  %v1284 = vmul.f32 %v1152, %v1283
  %v1285 = vld [vmem:[%s2] sm:$0xff]
  %v1287 = vlaneseq
  %v1288 = vshrl.u32 %v1287, 7
  %v1289 = vsub.s32 0, %v1288
  %v1290 = vrot.slane %v1285, %v1289
  %1292 = vbcast.lane.b32.xlu0 %v1290, 256
  %v1293 = vpop.permute.xlu0 %1292
  %v1294 = vlaneseq
  %v1295 = vshrl.u32 %v1294, 7
  %v1296 = vsub.s32 1, %v1295
  %v1297 = vrot.slane %v1285, %v1296
  %1299 = vbcast.lane.b32.xlu0 %v1297, 256
  %v1300 = vpop.permute.xlu0 %1299
  %v1301 = vlaneseq
  %v1302 = vshrl.u32 %v1301, 7
  %v1303 = vsub.s32 2, %v1302
  %v1304 = vrot.slane %v1285, %v1303
  %1306 = vbcast.lane.b32.xlu0 %v1304, 256
  %v1307 = vpop.permute.xlu0 %1306
  %v1308 = vlaneseq
  %v1309 = vshrl.u32 %v1308, 7
  %v1310 = vsub.s32 3, %v1309
  %v1311 = vrot.slane %v1285, %v1310
  %1313 = vbcast.lane.b32.xlu0 %v1311, 256
  %v1314 = vpop.permute.xlu0 %1313
  %v1315 = vlaneseq
  %v1316 = vshrl.u32 %v1315, 7
  %v1317 = vsub.s32 4, %v1316
  %v1318 = vrot.slane %v1285, %v1317
  %1320 = vbcast.lane.b32.xlu0 %v1318, 256
  %v1321 = vpop.permute.xlu0 %1320
  %v1322 = vlaneseq
  %v1323 = vshrl.u32 %v1322, 7
  %v1324 = vsub.s32 5, %v1323
  %v1325 = vrot.slane %v1285, %v1324
  %1327 = vbcast.lane.b32.xlu0 %v1325, 256
  %v1328 = vpop.permute.xlu0 %1327
  %v1329 = vlaneseq
  %v1330 = vshrl.u32 %v1329, 7
  %v1331 = vsub.s32 6, %v1330
  %v1332 = vrot.slane %v1285, %v1331
  %1334 = vbcast.lane.b32.xlu0 %v1332, 256
  %v1335 = vpop.permute.xlu0 %1334
  %v1336 = vlaneseq
  %v1337 = vshrl.u32 %v1336, 7
  %v1338 = vsub.s32 7, %v1337
  %v1339 = vrot.slane %v1285, %v1338
  %1341 = vbcast.lane.b32.xlu0 %v1339, 256
  %v1342 = vpop.permute.xlu0 %1341
  %v1351 = vmul.f32 %v1270, %v1293
  %v1352 = vmul.f32 %v1272, %v1300
  %v1353 = vmul.f32 %v1274, %v1307
  %v1354 = vmul.f32 %v1276, %v1314
  %v1355 = vmul.f32 %v1278, %v1321
  %v1356 = vmul.f32 %v1280, %v1328
  %v1357 = vmul.f32 %v1282, %v1335
  %v1358 = vmul.f32 %v1284, %v1342
  %v1359 = vcombine.high %v23, %v23
  %v1361 = vunpack.c.l.s4 1966171168
  %v1362 = vunpack.c.0.s8 %v1361
  %v1363 = vlaneseq
  %v1364 = vshrl.u32 %v1363, 7
  %v1365 = vsub.s32 %v1362, %v1364
  %v1366 = vrot.slane %v23, %v1365
  %v1368 = vunpack.c.l.s4 1966171168
  %v1369 = vunpack.c.0.s8 %v1368
  %v1370 = vlaneseq
  %v1371 = vshrl.u32 %v1370, 7
  %v1372 = vsub.s32 %v1369, %v1371
  %v1373 = vrot.slane %v1359, %v1372
  %v1374 = vcombine.high %v1366, %v1366
  %v1375 = vcombine.high %v1373, %v1373
  %v1377 = vunpack.c.l.s4 1966171168
  %v1378 = vunpack.c.0.s8 %v1377
  %v1379 = vlaneseq
  %v1380 = vshrl.u32 %v1379, 7
  %v1381 = vsub.s32 %v1378, %v1380
  %v1382 = vrot.slane %v1366, %v1381
  %v1384 = vunpack.c.l.s4 1966171168
  %v1385 = vunpack.c.0.s8 %v1384
  %v1386 = vlaneseq
  %v1387 = vshrl.u32 %v1386, 7
  %v1388 = vsub.s32 %v1385, %v1387
  %v1389 = vrot.slane %v1373, %v1388
  %v1391 = vunpack.c.l.s4 1966171168
  %v1392 = vunpack.c.0.s8 %v1391
  %v1393 = vlaneseq
  %v1394 = vshrl.u32 %v1393, 7
  %v1395 = vsub.s32 %v1392, %v1394
  %v1396 = vrot.slane %v1374, %v1395
  %v1398 = vunpack.c.l.s4 1966171168
  %v1399 = vunpack.c.0.s8 %v1398
  %v1400 = vlaneseq
  %v1401 = vshrl.u32 %v1400, 7
  %v1402 = vsub.s32 %v1399, %v1401
  %v1403 = vrot.slane %v1375, %v1402
  %v1404 = vcombine.high %v1382, %v1382
  %v1405 = vcombine.high %v1389, %v1389
  %v1406 = vcombine.high %v1396, %v1396
  %v1407 = vcombine.high %v1403, %v1403
  %v1408 = vcombine.high %v24, %v24
  %v1410 = vunpack.c.l.s4 1966171168
  %v1411 = vunpack.c.0.s8 %v1410
  %v1412 = vlaneseq
  %v1413 = vshrl.u32 %v1412, 7
  %v1414 = vsub.s32 %v1411, %v1413
  %v1415 = vrot.slane %v24, %v1414
  %v1417 = vunpack.c.l.s4 1966171168
  %v1418 = vunpack.c.0.s8 %v1417
  %v1419 = vlaneseq
  %v1420 = vshrl.u32 %v1419, 7
  %v1421 = vsub.s32 %v1418, %v1420
  %v1422 = vrot.slane %v1408, %v1421
  %v1423 = vcombine.high %v1415, %v1415
  %v1424 = vcombine.high %v1422, %v1422
  %v1426 = vunpack.c.l.s4 1966171168
  %v1427 = vunpack.c.0.s8 %v1426
  %v1428 = vlaneseq
  %v1429 = vshrl.u32 %v1428, 7
  %v1430 = vsub.s32 %v1427, %v1429
  %v1431 = vrot.slane %v1415, %v1430
  %v1433 = vunpack.c.l.s4 1966171168
  %v1434 = vunpack.c.0.s8 %v1433
  %v1435 = vlaneseq
  %v1436 = vshrl.u32 %v1435, 7
  %v1437 = vsub.s32 %v1434, %v1436
  %v1438 = vrot.slane %v1422, %v1437
  %v1440 = vunpack.c.l.s4 1966171168
  %v1441 = vunpack.c.0.s8 %v1440
  %v1442 = vlaneseq
  %v1443 = vshrl.u32 %v1442, 7
  %v1444 = vsub.s32 %v1441, %v1443
  %v1445 = vrot.slane %v1423, %v1444
  %v1447 = vunpack.c.l.s4 1966171168
  %v1448 = vunpack.c.0.s8 %v1447
  %v1449 = vlaneseq
  %v1450 = vshrl.u32 %v1449, 7
  %v1451 = vsub.s32 %v1448, %v1450
  %v1452 = vrot.slane %v1424, %v1451
  %v1453 = vcombine.high %v1431, %v1431
  %v1454 = vcombine.high %v1438, %v1438
  %v1455 = vcombine.high %v1445, %v1445
  %v1456 = vcombine.high %v1452, %v1452
  %v1457 = vcombine.high %v25, %v25
  %v1459 = vunpack.c.l.s4 1966171168
  %v1460 = vunpack.c.0.s8 %v1459
  %v1461 = vlaneseq
  %v1462 = vshrl.u32 %v1461, 7
  %v1463 = vsub.s32 %v1460, %v1462
  %v1464 = vrot.slane %v25, %v1463
  %v1466 = vunpack.c.l.s4 1966171168
  %v1467 = vunpack.c.0.s8 %v1466
  %v1468 = vlaneseq
  %v1469 = vshrl.u32 %v1468, 7
  %v1470 = vsub.s32 %v1467, %v1469
  %v1471 = vrot.slane %v1457, %v1470
  %v1472 = vcombine.high %v1464, %v1464
  %v1473 = vcombine.high %v1471, %v1471
  %v1475 = vunpack.c.l.s4 1966171168
  %v1476 = vunpack.c.0.s8 %v1475
  %v1477 = vlaneseq
  %v1478 = vshrl.u32 %v1477, 7
  %v1479 = vsub.s32 %v1476, %v1478
  %v1480 = vrot.slane %v1464, %v1479
  %v1482 = vunpack.c.l.s4 1966171168
  %v1483 = vunpack.c.0.s8 %v1482
  %v1484 = vlaneseq
  %v1485 = vshrl.u32 %v1484, 7
  %v1486 = vsub.s32 %v1483, %v1485
  %v1487 = vrot.slane %v1471, %v1486
  %v1489 = vunpack.c.l.s4 1966171168
  %v1490 = vunpack.c.0.s8 %v1489
  %v1491 = vlaneseq
  %v1492 = vshrl.u32 %v1491, 7
  %v1493 = vsub.s32 %v1490, %v1492
  %v1494 = vrot.slane %v1472, %v1493
  %v1496 = vunpack.c.l.s4 1966171168
  %v1497 = vunpack.c.0.s8 %v1496
  %v1498 = vlaneseq
  %v1499 = vshrl.u32 %v1498, 7
  %v1500 = vsub.s32 %v1497, %v1499
  %v1501 = vrot.slane %v1473, %v1500
  %v1502 = vcombine.high %v1480, %v1480
  %v1503 = vcombine.high %v1487, %v1487
  %v1504 = vcombine.high %v1494, %v1494
  %v1505 = vcombine.high %v1501, %v1501
  %v1506 = vcombine.high %v26, %v26
  %v1508 = vunpack.c.l.s4 1966171168
  %v1509 = vunpack.c.0.s8 %v1508
  %v1510 = vlaneseq
  %v1511 = vshrl.u32 %v1510, 7
  %v1512 = vsub.s32 %v1509, %v1511
  %v1513 = vrot.slane %v26, %v1512
  %v1515 = vunpack.c.l.s4 1966171168
  %v1516 = vunpack.c.0.s8 %v1515
  %v1517 = vlaneseq
  %v1518 = vshrl.u32 %v1517, 7
  %v1519 = vsub.s32 %v1516, %v1518
  %v1520 = vrot.slane %v1506, %v1519
  %v1521 = vcombine.high %v1513, %v1513
  %v1522 = vcombine.high %v1520, %v1520
  %v1524 = vunpack.c.l.s4 1966171168
  %v1525 = vunpack.c.0.s8 %v1524
  %v1526 = vlaneseq
  %v1527 = vshrl.u32 %v1526, 7
  %v1528 = vsub.s32 %v1525, %v1527
  %v1529 = vrot.slane %v1513, %v1528
  %v1531 = vunpack.c.l.s4 1966171168
  %v1532 = vunpack.c.0.s8 %v1531
  %v1533 = vlaneseq
  %v1534 = vshrl.u32 %v1533, 7
  %v1535 = vsub.s32 %v1532, %v1534
  %v1536 = vrot.slane %v1520, %v1535
  %v1538 = vunpack.c.l.s4 1966171168
  %v1539 = vunpack.c.0.s8 %v1538
  %v1540 = vlaneseq
  %v1541 = vshrl.u32 %v1540, 7
  %v1542 = vsub.s32 %v1539, %v1541
  %v1543 = vrot.slane %v1521, %v1542
  %v1545 = vunpack.c.l.s4 1966171168
  %v1546 = vunpack.c.0.s8 %v1545
  %v1547 = vlaneseq
  %v1548 = vshrl.u32 %v1547, 7
  %v1549 = vsub.s32 %v1546, %v1548
  %v1550 = vrot.slane %v1522, %v1549
  %v1551 = vcombine.high %v1529, %v1529
  %v1552 = vcombine.high %v1536, %v1536
  %v1553 = vcombine.high %v1543, %v1543
  %v1554 = vcombine.high %v1550, %v1550
  %v1555 = vcombine.high %v27, %v27
  %v1557 = vunpack.c.l.s4 1966171168
  %v1558 = vunpack.c.0.s8 %v1557
  %v1559 = vlaneseq
  %v1560 = vshrl.u32 %v1559, 7
  %v1561 = vsub.s32 %v1558, %v1560
  %v1562 = vrot.slane %v27, %v1561
  %v1564 = vunpack.c.l.s4 1966171168
  %v1565 = vunpack.c.0.s8 %v1564
  %v1566 = vlaneseq
  %v1567 = vshrl.u32 %v1566, 7
  %v1568 = vsub.s32 %v1565, %v1567
  %v1569 = vrot.slane %v1555, %v1568
  %v1570 = vcombine.high %v1562, %v1562
  %v1571 = vcombine.high %v1569, %v1569
  %v1573 = vunpack.c.l.s4 1966171168
  %v1574 = vunpack.c.0.s8 %v1573
  %v1575 = vlaneseq
  %v1576 = vshrl.u32 %v1575, 7
  %v1577 = vsub.s32 %v1574, %v1576
  %v1578 = vrot.slane %v1562, %v1577
  %v1580 = vunpack.c.l.s4 1966171168
  %v1581 = vunpack.c.0.s8 %v1580
  %v1582 = vlaneseq
  %v1583 = vshrl.u32 %v1582, 7
  %v1584 = vsub.s32 %v1581, %v1583
  %v1585 = vrot.slane %v1569, %v1584
  %v1587 = vunpack.c.l.s4 1966171168
  %v1588 = vunpack.c.0.s8 %v1587
  %v1589 = vlaneseq
  %v1590 = vshrl.u32 %v1589, 7
  %v1591 = vsub.s32 %v1588, %v1590
  %v1592 = vrot.slane %v1570, %v1591
  %v1594 = vunpack.c.l.s4 1966171168
  %v1595 = vunpack.c.0.s8 %v1594
  %v1596 = vlaneseq
  %v1597 = vshrl.u32 %v1596, 7
  %v1598 = vsub.s32 %v1595, %v1597
  %v1599 = vrot.slane %v1571, %v1598
  %v1600 = vcombine.high %v1578, %v1578
  %v1601 = vcombine.high %v1585, %v1585
  %v1602 = vcombine.high %v1592, %v1592
  %v1603 = vcombine.high %v1599, %v1599
  %1645 = vset.pattern.permute.xlu0 0
  %1646 = vperm.xlu0 %1645, %v1351
  %v1647 = vpop.permute.xlu0 %1646
  %1649 = vset.pattern.permute.xlu0 0
  %1650 = vperm.xlu0 %1649, %v1352
  %v1651 = vpop.permute.xlu0 %1650
  %1653 = vset.pattern.permute.xlu0 0
  %1654 = vperm.xlu0 %1653, %v1353
  %v1655 = vpop.permute.xlu0 %1654
  %1657 = vset.pattern.permute.xlu0 0
  %1658 = vperm.xlu0 %1657, %v1354
  %v1659 = vpop.permute.xlu0 %1658
  %1661 = vset.pattern.permute.xlu0 0
  %1662 = vperm.xlu0 %1661, %v1355
  %v1663 = vpop.permute.xlu0 %1662
  %1665 = vset.pattern.permute.xlu0 0
  %1666 = vperm.xlu0 %1665, %v1356
  %v1667 = vpop.permute.xlu0 %1666
  %1669 = vset.pattern.permute.xlu0 0
  %1670 = vperm.xlu0 %1669, %v1357
  %v1671 = vpop.permute.xlu0 %1670
  %1673 = vset.pattern.permute.xlu0 0
  %1674 = vperm.xlu0 %1673, %v1358
  %v1675 = vpop.permute.xlu0 %1674
  %v1676 = vlaneseq
  %v1677 = vshrl.u32 %v1676, 7
  %v1678 = vsub.s32 0, %v1677
  %v1679 = vrot.slane %v1647, %v1678
  %v1680 = vlaneseq
  %v1681 = vshrl.u32 %v1680, 7
  %v1682 = vsub.s32 1, %v1681
  %v1683 = vrot.slane %v1647, %v1682
  %v1684 = vlaneseq
  %v1685 = vshrl.u32 %v1684, 7
  %v1686 = vsub.s32 2, %v1685
  %v1687 = vrot.slane %v1647, %v1686
  %v1688 = vlaneseq
  %v1689 = vshrl.u32 %v1688, 7
  %v1690 = vsub.s32 3, %v1689
  %v1691 = vrot.slane %v1647, %v1690
  %v1692 = vlaneseq
  %v1693 = vshrl.u32 %v1692, 7
  %v1694 = vsub.s32 4, %v1693
  %v1695 = vrot.slane %v1647, %v1694
  %v1696 = vlaneseq
  %v1697 = vshrl.u32 %v1696, 7
  %v1698 = vsub.s32 0, %v1697
  %v1699 = vrot.slane %v1651, %v1698
  %v1700 = vlaneseq
  %v1701 = vshrl.u32 %v1700, 7
  %v1702 = vsub.s32 1, %v1701
  %v1703 = vrot.slane %v1651, %v1702
  %v1704 = vlaneseq
  %v1705 = vshrl.u32 %v1704, 7
  %v1706 = vsub.s32 2, %v1705
  %v1707 = vrot.slane %v1651, %v1706
  %v1708 = vlaneseq
  %v1709 = vshrl.u32 %v1708, 7
  %v1710 = vsub.s32 3, %v1709
  %v1711 = vrot.slane %v1651, %v1710
  %v1712 = vlaneseq
  %v1713 = vshrl.u32 %v1712, 7
  %v1714 = vsub.s32 4, %v1713
  %v1715 = vrot.slane %v1651, %v1714
  %v1716 = vlaneseq
  %v1717 = vshrl.u32 %v1716, 7
  %v1718 = vsub.s32 0, %v1717
  %v1719 = vrot.slane %v1655, %v1718
  %v1720 = vlaneseq
  %v1721 = vshrl.u32 %v1720, 7
  %v1722 = vsub.s32 1, %v1721
  %v1723 = vrot.slane %v1655, %v1722
  %v1724 = vlaneseq
  %v1725 = vshrl.u32 %v1724, 7
  %v1726 = vsub.s32 2, %v1725
  %v1727 = vrot.slane %v1655, %v1726
  %v1728 = vlaneseq
  %v1729 = vshrl.u32 %v1728, 7
  %v1730 = vsub.s32 3, %v1729
  %v1731 = vrot.slane %v1655, %v1730
  %v1732 = vlaneseq
  %v1733 = vshrl.u32 %v1732, 7
  %v1734 = vsub.s32 4, %v1733
  %v1735 = vrot.slane %v1655, %v1734
  %v1736 = vlaneseq
  %v1737 = vshrl.u32 %v1736, 7
  %v1738 = vsub.s32 0, %v1737
  %v1739 = vrot.slane %v1659, %v1738
  %v1740 = vlaneseq
  %v1741 = vshrl.u32 %v1740, 7
  %v1742 = vsub.s32 1, %v1741
  %v1743 = vrot.slane %v1659, %v1742
  %v1744 = vlaneseq
  %v1745 = vshrl.u32 %v1744, 7
  %v1746 = vsub.s32 2, %v1745
  %v1747 = vrot.slane %v1659, %v1746
  %v1748 = vlaneseq
  %v1749 = vshrl.u32 %v1748, 7
  %v1750 = vsub.s32 3, %v1749
  %v1751 = vrot.slane %v1659, %v1750
  %v1752 = vlaneseq
  %v1753 = vshrl.u32 %v1752, 7
  %v1754 = vsub.s32 4, %v1753
  %v1755 = vrot.slane %v1659, %v1754
  %v1756 = vlaneseq
  %v1757 = vshrl.u32 %v1756, 7
  %v1758 = vsub.s32 0, %v1757
  %v1759 = vrot.slane %v1663, %v1758
  %v1760 = vlaneseq
  %v1761 = vshrl.u32 %v1760, 7
  %v1762 = vsub.s32 1, %v1761
  %v1763 = vrot.slane %v1663, %v1762
  %v1764 = vlaneseq
  %v1765 = vshrl.u32 %v1764, 7
  %v1766 = vsub.s32 2, %v1765
  %v1767 = vrot.slane %v1663, %v1766
  %v1768 = vlaneseq
  %v1769 = vshrl.u32 %v1768, 7
  %v1770 = vsub.s32 3, %v1769
  %v1771 = vrot.slane %v1663, %v1770
  %v1772 = vlaneseq
  %v1773 = vshrl.u32 %v1772, 7
  %v1774 = vsub.s32 4, %v1773
  %v1775 = vrot.slane %v1663, %v1774
  %v1776 = vlaneseq
  %v1777 = vshrl.u32 %v1776, 7
  %v1778 = vsub.s32 0, %v1777
  %v1779 = vrot.slane %v1667, %v1778
  %v1780 = vlaneseq
  %v1781 = vshrl.u32 %v1780, 7
  %v1782 = vsub.s32 1, %v1781
  %v1783 = vrot.slane %v1667, %v1782
  %v1784 = vlaneseq
  %v1785 = vshrl.u32 %v1784, 7
  %v1786 = vsub.s32 2, %v1785
  %v1787 = vrot.slane %v1667, %v1786
  %v1788 = vlaneseq
  %v1789 = vshrl.u32 %v1788, 7
  %v1790 = vsub.s32 3, %v1789
  %v1791 = vrot.slane %v1667, %v1790
  %v1792 = vlaneseq
  %v1793 = vshrl.u32 %v1792, 7
  %v1794 = vsub.s32 4, %v1793
  %v1795 = vrot.slane %v1667, %v1794
  %v1796 = vlaneseq
  %v1797 = vshrl.u32 %v1796, 7
  %v1798 = vsub.s32 0, %v1797
  %v1799 = vrot.slane %v1671, %v1798
  %v1800 = vlaneseq
  %v1801 = vshrl.u32 %v1800, 7
  %v1802 = vsub.s32 1, %v1801
  %v1803 = vrot.slane %v1671, %v1802
  %v1804 = vlaneseq
  %v1805 = vshrl.u32 %v1804, 7
  %v1806 = vsub.s32 2, %v1805
  %v1807 = vrot.slane %v1671, %v1806
  %v1808 = vlaneseq
  %v1809 = vshrl.u32 %v1808, 7
  %v1810 = vsub.s32 3, %v1809
  %v1811 = vrot.slane %v1671, %v1810
  %v1812 = vlaneseq
  %v1813 = vshrl.u32 %v1812, 7
  %v1814 = vsub.s32 4, %v1813
  %v1815 = vrot.slane %v1671, %v1814
  %v1816 = vlaneseq
  %v1817 = vshrl.u32 %v1816, 7
  %v1818 = vsub.s32 0, %v1817
  %v1819 = vrot.slane %v1675, %v1818
  %v1820 = vlaneseq
  %v1821 = vshrl.u32 %v1820, 7
  %v1822 = vsub.s32 1, %v1821
  %v1823 = vrot.slane %v1675, %v1822
  %v1824 = vlaneseq
  %v1825 = vshrl.u32 %v1824, 7
  %v1826 = vsub.s32 2, %v1825
  %v1827 = vrot.slane %v1675, %v1826
  %v1828 = vlaneseq
  %v1829 = vshrl.u32 %v1828, 7
  %v1830 = vsub.s32 3, %v1829
  %v1831 = vrot.slane %v1675, %v1830
  %v1832 = vlaneseq
  %v1833 = vshrl.u32 %v1832, 7
  %v1834 = vsub.s32 4, %v1833
  %v1835 = vrot.slane %v1675, %v1834
  %v1876 = vmul.f32 %v1382, %v1679
  %v1877 = vmul.f32 %v1396, %v1683
  %v1878 = vmul.f32 %v1404, %v1687
  %v1879 = vmul.f32 %v1406, %v1691
  %v1880 = vmul.f32 %v1389, %v1695
  %v1881 = vmul.f32 %v1403, %v1699
  %v1882 = vmul.f32 %v1405, %v1703
  %v1883 = vmul.f32 %v1407, %v1707
  %v1884 = vmul.f32 %v1431, %v1711
  %v1885 = vmul.f32 %v1445, %v1715
  %v1886 = vmul.f32 %v1453, %v1719
  %v1887 = vmul.f32 %v1455, %v1723
  %v1888 = vmul.f32 %v1438, %v1727
  %v1889 = vmul.f32 %v1452, %v1731
  %v1890 = vmul.f32 %v1454, %v1735
  %v1891 = vmul.f32 %v1456, %v1739
  %v1892 = vmul.f32 %v1480, %v1743
  %v1893 = vmul.f32 %v1494, %v1747
  %v1894 = vmul.f32 %v1502, %v1751
  %v1895 = vmul.f32 %v1504, %v1755
  %v1896 = vmul.f32 %v1487, %v1759
  %v1897 = vmul.f32 %v1501, %v1763
  %v1898 = vmul.f32 %v1503, %v1767
  %v1899 = vmul.f32 %v1505, %v1771
  %v1900 = vmul.f32 %v1529, %v1775
  %v1901 = vmul.f32 %v1543, %v1779
  %v1902 = vmul.f32 %v1551, %v1783
  %v1903 = vmul.f32 %v1553, %v1787
  %v1904 = vmul.f32 %v1536, %v1791
  %v1905 = vmul.f32 %v1550, %v1795
  %v1906 = vmul.f32 %v1552, %v1799
  %v1907 = vmul.f32 %v1554, %v1803
  %v1908 = vmul.f32 %v1578, %v1807
  %v1909 = vmul.f32 %v1592, %v1811
  %v1910 = vmul.f32 %v1600, %v1815
  %v1911 = vmul.f32 %v1602, %v1819
  %v1912 = vmul.f32 %v1585, %v1823
  %v1913 = vmul.f32 %v1599, %v1827
  %v1914 = vmul.f32 %v1601, %v1831
  %v1915 = vmul.f32 %v1603, %v1835
  %v1956 = vcombine.low %v1876, %v1877
  %v1957 = vcombine.low %v1878, %v1879
  %v1959 = vunpack.c.l.s4 1966171168
  %v1960 = vunpack.c.0.s8 %v1959
  %v1961 = vlaneseq
  %v1962 = vshrl.u32 %v1961, 7
  %v1963 = vsub.s32 %v1960, %v1962
  %v1964 = vrot.slane %v1956, %v1963
  %v1966 = vunpack.c.l.s4 1966171168
  %v1967 = vunpack.c.0.s8 %v1966
  %v1968 = vlaneseq
  %v1969 = vshrl.u32 %v1968, 7
  %v1970 = vsub.s32 %v1967, %v1969
  %v1971 = vrot.slane %v1957, %v1970
  %v1973 = vunpack.c.l.s4 1966171168
  %v1974 = vunpack.c.0.s8 %v1973
  %v1975 = vlaneseq
  %v1976 = vshrl.u32 %v1975, 7
  %v1977 = vsub.s32 %v1974, %v1976
  %v1978 = vrot.slane %v1880, %v1977
  %v1979 = vcombine.low %v1964, %v1971
  %v1981 = vunpack.c.l.s4 1966171168
  %v1982 = vunpack.c.0.s8 %v1981
  %v1983 = vlaneseq
  %v1984 = vshrl.u32 %v1983, 7
  %v1985 = vsub.s32 %v1982, %v1984
  %v1986 = vrot.slane %v1979, %v1985
  %v1988 = vunpack.c.l.s4 1966171168
  %v1989 = vunpack.c.0.s8 %v1988
  %v1990 = vlaneseq
  %v1991 = vshrl.u32 %v1990, 7
  %v1992 = vsub.s32 %v1989, %v1991
  %v1993 = vrot.slane %v1978, %v1992
  %v1994 = vcombine.low %v1986, %v1993
  %v1995 = vcombine.low %v1881, %v1882
  %v1996 = vcombine.low %v1883, %v1884
  %v1998 = vunpack.c.l.s4 1966171168
  %v1999 = vunpack.c.0.s8 %v1998
  %v2000 = vlaneseq
  %v2001 = vshrl.u32 %v2000, 7
  %v2002 = vsub.s32 %v1999, %v2001
  %v2003 = vrot.slane %v1995, %v2002
  %v2005 = vunpack.c.l.s4 1966171168
  %v2006 = vunpack.c.0.s8 %v2005
  %v2007 = vlaneseq
  %v2008 = vshrl.u32 %v2007, 7
  %v2009 = vsub.s32 %v2006, %v2008
  %v2010 = vrot.slane %v1996, %v2009
  %v2012 = vunpack.c.l.s4 1966171168
  %v2013 = vunpack.c.0.s8 %v2012
  %v2014 = vlaneseq
  %v2015 = vshrl.u32 %v2014, 7
  %v2016 = vsub.s32 %v2013, %v2015
  %v2017 = vrot.slane %v1885, %v2016
  %v2018 = vcombine.low %v2003, %v2010
  %v2020 = vunpack.c.l.s4 1966171168
  %v2021 = vunpack.c.0.s8 %v2020
  %v2022 = vlaneseq
  %v2023 = vshrl.u32 %v2022, 7
  %v2024 = vsub.s32 %v2021, %v2023
  %v2025 = vrot.slane %v2018, %v2024
  %v2027 = vunpack.c.l.s4 1966171168
  %v2028 = vunpack.c.0.s8 %v2027
  %v2029 = vlaneseq
  %v2030 = vshrl.u32 %v2029, 7
  %v2031 = vsub.s32 %v2028, %v2030
  %v2032 = vrot.slane %v2017, %v2031
  %v2033 = vcombine.low %v2025, %v2032
  %v2034 = vcombine.low %v1886, %v1887
  %v2035 = vcombine.low %v1888, %v1889
  %v2037 = vunpack.c.l.s4 1966171168
  %v2038 = vunpack.c.0.s8 %v2037
  %v2039 = vlaneseq
  %v2040 = vshrl.u32 %v2039, 7
  %v2041 = vsub.s32 %v2038, %v2040
  %v2042 = vrot.slane %v2034, %v2041
  %v2044 = vunpack.c.l.s4 1966171168
  %v2045 = vunpack.c.0.s8 %v2044
  %v2046 = vlaneseq
  %v2047 = vshrl.u32 %v2046, 7
  %v2048 = vsub.s32 %v2045, %v2047
  %v2049 = vrot.slane %v2035, %v2048
  %v2051 = vunpack.c.l.s4 1966171168
  %v2052 = vunpack.c.0.s8 %v2051
  %v2053 = vlaneseq
  %v2054 = vshrl.u32 %v2053, 7
  %v2055 = vsub.s32 %v2052, %v2054
  %v2056 = vrot.slane %v1890, %v2055
  %v2057 = vcombine.low %v2042, %v2049
  %v2059 = vunpack.c.l.s4 1966171168
  %v2060 = vunpack.c.0.s8 %v2059
  %v2061 = vlaneseq
  %v2062 = vshrl.u32 %v2061, 7
  %v2063 = vsub.s32 %v2060, %v2062
  %v2064 = vrot.slane %v2057, %v2063
  %v2066 = vunpack.c.l.s4 1966171168
  %v2067 = vunpack.c.0.s8 %v2066
  %v2068 = vlaneseq
  %v2069 = vshrl.u32 %v2068, 7
  %v2070 = vsub.s32 %v2067, %v2069
  %v2071 = vrot.slane %v2056, %v2070
  %v2072 = vcombine.low %v2064, %v2071
  %v2073 = vcombine.low %v1891, %v1892
  %v2074 = vcombine.low %v1893, %v1894
  %v2076 = vunpack.c.l.s4 1966171168
  %v2077 = vunpack.c.0.s8 %v2076
  %v2078 = vlaneseq
  %v2079 = vshrl.u32 %v2078, 7
  %v2080 = vsub.s32 %v2077, %v2079
  %v2081 = vrot.slane %v2073, %v2080
  %v2083 = vunpack.c.l.s4 1966171168
  %v2084 = vunpack.c.0.s8 %v2083
  %v2085 = vlaneseq
  %v2086 = vshrl.u32 %v2085, 7
  %v2087 = vsub.s32 %v2084, %v2086
  %v2088 = vrot.slane %v2074, %v2087
  %v2090 = vunpack.c.l.s4 1966171168
  %v2091 = vunpack.c.0.s8 %v2090
  %v2092 = vlaneseq
  %v2093 = vshrl.u32 %v2092, 7
  %v2094 = vsub.s32 %v2091, %v2093
  %v2095 = vrot.slane %v1895, %v2094
  %v2096 = vcombine.low %v2081, %v2088
  %v2098 = vunpack.c.l.s4 1966171168
  %v2099 = vunpack.c.0.s8 %v2098
  %v2100 = vlaneseq
  %v2101 = vshrl.u32 %v2100, 7
  %v2102 = vsub.s32 %v2099, %v2101
  %v2103 = vrot.slane %v2096, %v2102
  %v2105 = vunpack.c.l.s4 1966171168
  %v2106 = vunpack.c.0.s8 %v2105
  %v2107 = vlaneseq
  %v2108 = vshrl.u32 %v2107, 7
  %v2109 = vsub.s32 %v2106, %v2108
  %v2110 = vrot.slane %v2095, %v2109
  %v2111 = vcombine.low %v2103, %v2110
  %v2112 = vcombine.low %v1896, %v1897
  %v2113 = vcombine.low %v1898, %v1899
  %v2115 = vunpack.c.l.s4 1966171168
  %v2116 = vunpack.c.0.s8 %v2115
  %v2117 = vlaneseq
  %v2118 = vshrl.u32 %v2117, 7
  %v2119 = vsub.s32 %v2116, %v2118
  %v2120 = vrot.slane %v2112, %v2119
  %v2122 = vunpack.c.l.s4 1966171168
  %v2123 = vunpack.c.0.s8 %v2122
  %v2124 = vlaneseq
  %v2125 = vshrl.u32 %v2124, 7
  %v2126 = vsub.s32 %v2123, %v2125
  %v2127 = vrot.slane %v2113, %v2126
  %v2129 = vunpack.c.l.s4 1966171168
  %v2130 = vunpack.c.0.s8 %v2129
  %v2131 = vlaneseq
  %v2132 = vshrl.u32 %v2131, 7
  %v2133 = vsub.s32 %v2130, %v2132
  %v2134 = vrot.slane %v1900, %v2133
  %v2135 = vcombine.low %v2120, %v2127
  %v2137 = vunpack.c.l.s4 1966171168
  %v2138 = vunpack.c.0.s8 %v2137
  %v2139 = vlaneseq
  %v2140 = vshrl.u32 %v2139, 7
  %v2141 = vsub.s32 %v2138, %v2140
  %v2142 = vrot.slane %v2135, %v2141
  %v2144 = vunpack.c.l.s4 1966171168
  %v2145 = vunpack.c.0.s8 %v2144
  %v2146 = vlaneseq
  %v2147 = vshrl.u32 %v2146, 7
  %v2148 = vsub.s32 %v2145, %v2147
  %v2149 = vrot.slane %v2134, %v2148
  %v2150 = vcombine.low %v2142, %v2149
  %v2151 = vcombine.low %v1901, %v1902
  %v2152 = vcombine.low %v1903, %v1904
  %v2154 = vunpack.c.l.s4 1966171168
  %v2155 = vunpack.c.0.s8 %v2154
  %v2156 = vlaneseq
  %v2157 = vshrl.u32 %v2156, 7
  %v2158 = vsub.s32 %v2155, %v2157
  %v2159 = vrot.slane %v2151, %v2158
  %v2161 = vunpack.c.l.s4 1966171168
  %v2162 = vunpack.c.0.s8 %v2161
  %v2163 = vlaneseq
  %v2164 = vshrl.u32 %v2163, 7
  %v2165 = vsub.s32 %v2162, %v2164
  %v2166 = vrot.slane %v2152, %v2165
  %v2168 = vunpack.c.l.s4 1966171168
  %v2169 = vunpack.c.0.s8 %v2168
  %v2170 = vlaneseq
  %v2171 = vshrl.u32 %v2170, 7
  %v2172 = vsub.s32 %v2169, %v2171
  %v2173 = vrot.slane %v1905, %v2172
  %v2174 = vcombine.low %v2159, %v2166
  %v2176 = vunpack.c.l.s4 1966171168
  %v2177 = vunpack.c.0.s8 %v2176
  %v2178 = vlaneseq
  %v2179 = vshrl.u32 %v2178, 7
  %v2180 = vsub.s32 %v2177, %v2179
  %v2181 = vrot.slane %v2174, %v2180
  %v2183 = vunpack.c.l.s4 1966171168
  %v2184 = vunpack.c.0.s8 %v2183
  %v2185 = vlaneseq
  %v2186 = vshrl.u32 %v2185, 7
  %v2187 = vsub.s32 %v2184, %v2186
  %v2188 = vrot.slane %v2173, %v2187
  %v2189 = vcombine.low %v2181, %v2188
  %v2190 = vcombine.low %v1906, %v1907
  %v2191 = vcombine.low %v1908, %v1909
  %v2193 = vunpack.c.l.s4 1966171168
  %v2194 = vunpack.c.0.s8 %v2193
  %v2195 = vlaneseq
  %v2196 = vshrl.u32 %v2195, 7
  %v2197 = vsub.s32 %v2194, %v2196
  %v2198 = vrot.slane %v2190, %v2197
  %v2200 = vunpack.c.l.s4 1966171168
  %v2201 = vunpack.c.0.s8 %v2200
  %v2202 = vlaneseq
  %v2203 = vshrl.u32 %v2202, 7
  %v2204 = vsub.s32 %v2201, %v2203
  %v2205 = vrot.slane %v2191, %v2204
  %v2207 = vunpack.c.l.s4 1966171168
  %v2208 = vunpack.c.0.s8 %v2207
  %v2209 = vlaneseq
  %v2210 = vshrl.u32 %v2209, 7
  %v2211 = vsub.s32 %v2208, %v2210
  %v2212 = vrot.slane %v1910, %v2211
  %v2213 = vcombine.low %v2198, %v2205
  %v2215 = vunpack.c.l.s4 1966171168
  %v2216 = vunpack.c.0.s8 %v2215
  %v2217 = vlaneseq
  %v2218 = vshrl.u32 %v2217, 7
  %v2219 = vsub.s32 %v2216, %v2218
  %v2220 = vrot.slane %v2213, %v2219
  %v2222 = vunpack.c.l.s4 1966171168
  %v2223 = vunpack.c.0.s8 %v2222
  %v2224 = vlaneseq
  %v2225 = vshrl.u32 %v2224, 7
  %v2226 = vsub.s32 %v2223, %v2225
  %v2227 = vrot.slane %v2212, %v2226
  %v2228 = vcombine.low %v2220, %v2227
  %v2229 = vcombine.low %v1911, %v1912
  %v2230 = vcombine.low %v1913, %v1914
  %v2232 = vunpack.c.l.s4 1966171168
  %v2233 = vunpack.c.0.s8 %v2232
  %v2234 = vlaneseq
  %v2235 = vshrl.u32 %v2234, 7
  %v2236 = vsub.s32 %v2233, %v2235
  %v2237 = vrot.slane %v2229, %v2236
  %v2239 = vunpack.c.l.s4 1966171168
  %v2240 = vunpack.c.0.s8 %v2239
  %v2241 = vlaneseq
  %v2242 = vshrl.u32 %v2241, 7
  %v2243 = vsub.s32 %v2240, %v2242
  %v2244 = vrot.slane %v2230, %v2243
  %v2246 = vunpack.c.l.s4 1966171168
  %v2247 = vunpack.c.0.s8 %v2246
  %v2248 = vlaneseq
  %v2249 = vshrl.u32 %v2248, 7
  %v2250 = vsub.s32 %v2247, %v2249
  %v2251 = vrot.slane %v1915, %v2250
  %v2252 = vcombine.low %v2237, %v2244
  %v2254 = vunpack.c.l.s4 1966171168
  %v2255 = vunpack.c.0.s8 %v2254
  %v2256 = vlaneseq
  %v2257 = vshrl.u32 %v2256, 7
  %v2258 = vsub.s32 %v2255, %v2257
  %v2259 = vrot.slane %v2252, %v2258
  %v2261 = vunpack.c.l.s4 1966171168
  %v2262 = vunpack.c.0.s8 %v2261
  %v2263 = vlaneseq
  %v2264 = vshrl.u32 %v2263, 7
  %v2265 = vsub.s32 %v2262, %v2264
  %v2266 = vrot.slane %v2251, %v2265
  %v2267 = vcombine.low %v2259, %v2266
  %vm2276 = vcmask 258048
  %v2277 = vsel %vm2276, %v1994, 0.0
  %v2278 = vrot.slane %v2277, 4
  %v2279 = vadd.f32 %v2277, %v2278
  %v2280 = vrot.slane %v2279, 2
  %v2281 = vadd.f32 %v2279, %v2280
  %v2282 = vrot.slane %v2281, 1
  %v2283 = vadd.f32 %v2281, %v2282
  %v2284 = vsel %vm2276, %v2033, 0.0
  %v2285 = vrot.slane %v2284, 4
  %v2286 = vadd.f32 %v2284, %v2285
  %v2287 = vrot.slane %v2286, 2
  %v2288 = vadd.f32 %v2286, %v2287
  %v2289 = vrot.slane %v2288, 1
  %v2290 = vadd.f32 %v2288, %v2289
  %v2291 = vsel %vm2276, %v2072, 0.0
  %v2292 = vrot.slane %v2291, 4
  %v2293 = vadd.f32 %v2291, %v2292
  %v2294 = vrot.slane %v2293, 2
  %v2295 = vadd.f32 %v2293, %v2294
  %v2296 = vrot.slane %v2295, 1
  %v2297 = vadd.f32 %v2295, %v2296
  %v2298 = vsel %vm2276, %v2111, 0.0
  %v2299 = vrot.slane %v2298, 4
  %v2300 = vadd.f32 %v2298, %v2299
  %v2301 = vrot.slane %v2300, 2
  %v2302 = vadd.f32 %v2300, %v2301
  %v2303 = vrot.slane %v2302, 1
  %v2304 = vadd.f32 %v2302, %v2303
  %v2305 = vsel %vm2276, %v2150, 0.0
  %v2306 = vrot.slane %v2305, 4
  %v2307 = vadd.f32 %v2305, %v2306
  %v2308 = vrot.slane %v2307, 2
  %v2309 = vadd.f32 %v2307, %v2308
  %v2310 = vrot.slane %v2309, 1
  %v2311 = vadd.f32 %v2309, %v2310
  %v2312 = vsel %vm2276, %v2189, 0.0
  %v2313 = vrot.slane %v2312, 4
  %v2314 = vadd.f32 %v2312, %v2313
  %v2315 = vrot.slane %v2314, 2
  %v2316 = vadd.f32 %v2314, %v2315
  %v2317 = vrot.slane %v2316, 1
  %v2318 = vadd.f32 %v2316, %v2317
  %v2319 = vsel %vm2276, %v2228, 0.0
  %v2320 = vrot.slane %v2319, 4
  %v2321 = vadd.f32 %v2319, %v2320
  %v2322 = vrot.slane %v2321, 2
  %v2323 = vadd.f32 %v2321, %v2322
  %v2324 = vrot.slane %v2323, 1
  %v2325 = vadd.f32 %v2323, %v2324
  %v2326 = vsel %vm2276, %v2267, 0.0
  %v2327 = vrot.slane %v2326, 4
  %v2328 = vadd.f32 %v2326, %v2327
  %v2329 = vrot.slane %v2328, 2
  %v2330 = vadd.f32 %v2328, %v2329
  %v2331 = vrot.slane %v2330, 1
  %v2332 = vadd.f32 %v2330, %v2331
  %v2341 = vsel %vm1069, %v2290, %v2283
  %v2342 = vsel %vm1071, %v2297, %v2341
  %v2343 = vsel %vm1073, %v2304, %v2342
  %v2344 = vsel %vm1075, %v2311, %v2343
  %v2345 = vsel %vm1077, %v2318, %v2344
  %v2346 = vsel %vm1079, %v2325, %v2345
  %v2347 = vsel %vm1081, %v2332, %v2346
  %vm2349 = vcmask 261120
  %2350 = vst.msk [vmem:[%s6] sm:$0xff] %vm2349, %v2347
  // Predicated region
  $region26: #{leaf_attention_forward.3} parent=0 // pred_check
    _
  $region27: #{leaf_attention_forward.3} parent=0 // pred_check_branch
    %2352 = sbr.rel (0) target = $region29
  $region28: #{leaf_attention_forward.3} parent=0 // pred_region
    _
  $region29: #{leaf_attention_forward.3} parent=0 // pred_fallthru
    _
  // Predicated region
  $region30: #{leaf_attention_forward.3} parent=0 // pred_check
    _
  $region31: #{leaf_attention_forward.3} parent=0 // pred_check_branch
    %2354 = sbr.rel (0) target = $region33
  $region32: #{leaf_attention_forward.3} parent=0 // pred_region
    _
  $region33: #{leaf_attention_forward.3} parent=0 // pred_fallthru
    _

</llo_original>
